<compile_context>
chip_gen: v7x
topology: tpu7x:2x2x1
jax: 0.10.0
libtpu: 0.0.40
codegen_flags: <defaults>
</compile_context>

<pallas_src>
import math
import functools

import numpy as np
import jax
import jax.numpy as jnp
from jax import lax
from jax.experimental import pallas as pl
from jax.experimental.pallas import tpu as pltpu


# ----------------------------------------------------------------------------
# Kernel: fused QKV projection + per-head attention + fused output linear
# + ReLU + sequence-softmax weighting + weighted sum, for `batch_tile` batches.
# ----------------------------------------------------------------------------
def _mha_kernel(x_ref, qkv_pe_ref, wqkv_ref, wl_ref, bl_ref, wl2_ref, bl2_ref,
                out_ref, res_ref, *, num_heads, seq_len, batch_tile):
    St, E = x_ref.shape                       # St = batch_tile * seq_len
    S = seq_len
    dh = E // num_heads
    # NOTE: scale is 1/sqrt(embed_dim) (not 1/sqrt(dh)); intentional — it
    # matches the PyTorch module (`/ math.sqrt(embed_dim)`).
    scale = 1.0 / math.sqrt(E)

    # Single fused QKV projection for the whole folded batch slab: 3E = 96
    # output lanes per MXU pass instead of 3*H separate 8-lane matmuls.
    qkv_x = jnp.dot(x_ref[...], wqkv_ref[...],
                    preferred_element_type=jnp.float32)           # (St, 3E)

    pe_qkv = qkv_pe_ref[...]                  # (S, 3E): pe @ Wqkv + bqkv (grid-invariant)
    wl = wl_ref[...]                          # (E, E)
    bl_row = bl_ref[...]                      # (1, E)
    wl2 = wl2_ref[...]                        # (E, 1)
    bl2 = bl2_ref[0]                          # scalar from SMEM

    out_rows = []
    res_rows = []
    for b in range(batch_tile):
        r = slice(b * S, (b + 1) * S)         # static, sublane-aligned (S mult of 8)
        qkv_b = qkv_x[r, :] + pe_qkv          # (S, 3E); PE+bias folded in once

        acc = None
        for h in range(num_heads):
            qh = qkv_b[:, h * dh:(h + 1) * dh]                    # (S, dh)
            kh = qkv_b[:, E + h * dh:E + (h + 1) * dh]            # (S, dh)
            vh = qkv_b[:, 2 * E + h * dh:2 * E + (h + 1) * dh]    # (S, dh)

            # q @ k^T directly via dot_general (no materialized transpose)
            s = lax.dot_general(qh, kh, (((1,), (1,)), ((), ())),
                                preferred_element_type=jnp.float32) * scale
            s = s - jnp.max(s, axis=-1, keepdims=True)
            p = jnp.exp(s)
            p = p / jnp.sum(p, axis=-1, keepdims=True)            # exact recip (tiny)

            ob = jnp.dot(p, vh, preferred_element_type=jnp.float32)        # (S, dh)
            # head-concat + output projection fused: acc += ob @ Wl[h rows]
            contrib = jnp.dot(ob, wl[h * dh:(h + 1) * dh, :],
                              preferred_element_type=jnp.float32)          # (S, E)
            acc = contrib if acc is None else acc + contrib

        ob_full = jnp.maximum(acc + bl_row, 0.0)                  # (S, E) post-ReLU
        out_rows.append(ob_full)

        # linear2 logits on the MXU, softmax over the sequence (sublane) axis
        logits = jnp.dot(ob_full, wl2, preferred_element_type=jnp.float32) + bl2  # (S, 1)
        logits = logits - jnp.max(logits, axis=0, keepdims=True)
        wexp = jnp.exp(logits)
        w = wexp / jnp.sum(wexp, axis=0, keepdims=True)           # (S, 1)

        # Weighted sum on the MXU: (1, S) x (S, E) contraction over the seq axis
        res_rows.append(lax.dot_general(w, ob_full, (((0,), (0,)), ((), ())),
                                        preferred_element_type=jnp.float32))  # (1, E)

    # Single store per output per grid step.
    out_ref[...] = jnp.concatenate(out_rows, axis=0)              # (bt*S, E)
    res_ref[...] = jnp.stack(res_rows, axis=0)                    # (bt, 1, E)


# ----------------------------------------------------------------------------
# Wrapper helpers
# ----------------------------------------------------------------------------
def _positional_encoding(seq_len, embed_dim):
    pos = jnp.arange(seq_len, dtype=jnp.float32).reshape(seq_len, 1)
    even_idx = jnp.arange(0, embed_dim, 2, dtype=jnp.float32)
    denom = jnp.power(10000.0, even_idx / embed_dim)
    even_pe = jnp.sin(pos / denom)
    odd_pe = jnp.cos(pos / denom)
    pe = jnp.stack([even_pe, odd_pe], axis=2).reshape(seq_len, embed_dim)
    return pe


def _num_tensorcores_per_chip():
    # v7x has 2 TensorCores per chip; v5e/v6e have 1.
    try:
        kind = jax.devices()[0].device_kind.lower()
    except Exception:
        return 1
    return 2 if "v7" in kind else 1


def _pick_batch_tile(B, S):
    """Generation-aware batch folding.

    Single-TC chips (v5e/v6e): fold everything -> grid = 1 (no per-step
    pipeline overhead, taller MXU matmuls).  v7x: keep an even number of grid
    steps so both TensorCores get work on the "parallel" batch axis.  Cap the
    folded slab at ~1024 rows to stay well inside VMEM (v7x: 64 MiB).
    """
    row_cap = max(1, 1024 // max(1, S))
    two_cores = _num_tensorcores_per_chip() > 1
    cap = min(B, row_cap) if not two_cores else min(max(1, B // 2), row_cap)
    bt = 1
    for c in range(1, cap + 1):
        if B % c != 0:
            continue
        if two_cores and (B // c) % 2 != 0:
            continue
        bt = c
    return bt


def multi_head_attention(x, params, num_heads, batch_tile=None):
    """x: (B, S, E) float32. Returns (result (B, E), out (B, S, E))."""
    B, S, E = x.shape
    dh = E // num_heads
    bt = _pick_batch_tile(B, S) if batch_tile is None else batch_tile
    assert B % bt == 0

    wqkv = jnp.asarray(params["wqkv"])   # (3E, E) PyTorch Linear layout
    bqkv = jnp.asarray(params["bqkv"])   # (3E,)
    wl = jnp.asarray(params["wl"])       # (E, E)
    bl = jnp.asarray(params["bl"])       # (E,)
    wl2 = jnp.asarray(params["wl2"])     # (1, E)
    bl2 = jnp.asarray(params["bl2"])     # (1,)

    # Column permutation so the kernel sees [Q all-heads | K all-heads | V all-heads],
    # matching reshape(B,S,H,3*dh) -> permute -> chunk in the PyTorch module.
    perm = np.array([h * 3 * dh + j * dh + i
                     for j in range(3) for h in range(num_heads) for i in range(dh)],
                    dtype=np.int32)
    wqkv_t = wqkv.T[:, perm]                                     # (E, 3E)

    # PE only feeds the QKV linear, so fold its contribution (and the QKV bias)
    # into a single grid-invariant (S, 3E) operand:  qkv(x+pe) = x@W + (pe@W + b).
    pe = _positional_encoding(S, E)                              # (S, E)
    qkv_pe = pe @ wqkv_t + bqkv[perm][None, :]                   # (S, 3E)

    wl_t = wl.T                                                  # (E, E)
    bl_row = bl.reshape(1, E)                                    # (1, E)
    wl2_col = wl2.reshape(E, 1)                                  # (E, 1)
    bl2_s = bl2.reshape(1)                                       # (1,) SMEM scalar

    x2 = x.reshape(B * S, E)                                     # batch-folded rows

    kernel = functools.partial(_mha_kernel, num_heads=num_heads, seq_len=S,
                               batch_tile=bt)

    grid_spec = pltpu.PrefetchScalarGridSpec(
        num_scalar_prefetch=0,
        grid=(B // bt,),
        in_specs=[
            pl.BlockSpec((bt * S, E), lambda i: (i, 0)),        # x (folded rows)
            pl.BlockSpec((S, 3 * E), lambda i: (0, 0)),         # pe @ Wqkv + bqkv
            pl.BlockSpec((E, 3 * E), lambda i: (0, 0)),         # Wqkv (permuted, transposed)
            pl.BlockSpec((E, E), lambda i: (0, 0)),             # Wlinear (transposed)
            pl.BlockSpec((1, E), lambda i: (0, 0)),             # blinear
            pl.BlockSpec((E, 1), lambda i: (0, 0)),             # Wlinear2 column
            pl.BlockSpec(memory_space=pltpu.MemorySpace.SMEM),  # blinear2 scalar
        ],
        out_specs=[
            pl.BlockSpec((bt * S, E), lambda i: (i, 0)),        # out rows
            pl.BlockSpec((bt, 1, E), lambda i: (i, 0, 0)),      # result rows
        ],
    )

    flops = B * (2 * S * E * 3 * E                  # fused QKV projection
                 + num_heads * (4 * S * S * dh)     # scores + attn @ v
                 + 2 * S * E * E                    # output projection (fused per head)
                 + 2 * S * E                        # linear2
                 + 2 * S * E)                       # weighted sum (MXU)
    transcendentals = B * (num_heads * S * S + S)
    bytes_accessed = 4 * (x2.size + qkv_pe.size + wqkv_t.size + wl_t.size
                          + bl_row.size + wl2_col.size + 1
                          + B * S * E + B * E)
    cost = pl.CostEstimate(flops=flops, transcendentals=transcendentals,
                           bytes_accessed=bytes_accessed)

    out_flat, res = pl.pallas_call(
        kernel,
        grid_spec=grid_spec,
        out_shape=(
            jax.ShapeDtypeStruct((B * S, E), jnp.float32),
            jax.ShapeDtypeStruct((B, 1, E), jnp.float32),
        ),
        compiler_params=pltpu.CompilerParams(
            dimension_semantics=("parallel",)),
        cost_estimate=cost,
    )(x2, qkv_pe, wqkv_t, wl_t, bl_row, wl2_col, bl2_s)

    return res.reshape(B, E), out_flat.reshape(B, S, E)


# ----------------------------------------------------------------------------
# Pure-JAX reference (mirrors the PyTorch forward) for correctness checking.
# ----------------------------------------------------------------------------
def _reference(x, params, num_heads):
    B, S, E = x.shape
    dh = E // num_heads
    pe = _positional_encoding(S, E)
    xp = x + pe[None]
    qkv = xp @ params["wqkv"].T + params["bqkv"]                    # (B, S, 3E)
    qkv = qkv.reshape(B, S, num_heads, 3 * dh).transpose(0, 2, 1, 3)
    q, k, v = jnp.split(qkv, 3, axis=-1)
    attn = jnp.einsum("bhqd,bhkd->bhqk", q, k) / math.sqrt(E)
    attn = jax.nn.softmax(attn, axis=-1)
    vals = jnp.einsum("bhqk,bhkd->bhqd", attn, v)
    vals = vals.transpose(0, 2, 1, 3).reshape(B, S, E)
    out = jnp.maximum(vals @ params["wl"].T + params["bl"], 0.0)
    w = out @ params["wl2"].T + params["bl2"]                       # (B, S, 1)
    w = jax.nn.softmax(w, axis=1)
    result = jnp.sum(w * out, axis=1)
    return result, out


if __name__ == "__main__":
    B, S, E, H = 2, 8, 32, 4

    key = jax.random.PRNGKey(0)
    kx, k1, k2, k3, k4, k5, k6 = jax.random.split(key, 7)

    x = jax.random.normal(kx, (B, S, E), dtype=jnp.float32)

    def uinit(k, shape, fan_in):
        bound = 1.0 / math.sqrt(fan_in)
        return jax.random.uniform(k, shape, jnp.float32, -bound, bound)

    params = {
        "wqkv": uinit(k1, (3 * E, E), E),
        "bqkv": uinit(k2, (3 * E,), E),
        "wl":   uinit(k3, (E, E), E),
        "bl":   uinit(k4, (E,), E),
        "wl2":  uinit(k5, (1, E), E),
        "bl2":  uinit(k6, (1,), E),
    }

    result, out = multi_head_attention(x, params, H)
    jax.block_until_ready((result, out))

    ref_result, ref_out = _reference(x, params, H)
    # exact softmax denominators now -> tight tolerances
    np.testing.assert_allclose(np.asarray(out), np.asarray(ref_out),
                               rtol=1e-4, atol=1e-4)
    np.testing.assert_allclose(np.asarray(result), np.asarray(ref_result),
                               rtol=1e-4, atol=1e-4)

    print("KERNEL_OK")
</pallas_src>

<mosaic_0001>
module attributes {stable_mosaic.version = 11 : i64} {
  func.func @_mha_kernel(%arg0: i32, %arg1: memref<16x32xf32, #tpu.memory_space<vmem>>, %arg2: memref<8x96xf32, #tpu.memory_space<vmem>>, %arg3: memref<32x96xf32, #tpu.memory_space<vmem>>, %arg4: memref<32x32xf32, #tpu.memory_space<vmem>>, %arg5: memref<1x32xf32, #tpu.memory_space<vmem>>, %arg6: memref<32x1xf32, #tpu.memory_space<vmem>>, %arg7: memref<1xf32, #tpu.memory_space<smem>>, %arg8: memref<16x32xf32, #tpu.memory_space<vmem>>, %arg9: memref<2x1x32xf32, #tpu.memory_space<vmem>>) attributes {dimension_semantics = [#tpu.dimension_semantics<parallel>], iteration_bounds = array<i64: 1>, scalar_prefetch = 0 : i64, scratch_operands = 0 : i64, tpu.core_type = #tpu.core_type<tc>, window_params = [{transform_indices = @transform_0, window_bounds = array<i64: 16, 32>}, {pipeline_mode = #tpu.pipeline_mode<synchronous>, transform_indices = @transform_1, window_bounds = array<i64: 8, 96>}, {pipeline_mode = #tpu.pipeline_mode<synchronous>, transform_indices = @transform_2, window_bounds = array<i64: 32, 96>}, {pipeline_mode = #tpu.pipeline_mode<synchronous>, transform_indices = @transform_3, window_bounds = array<i64: 32, 32>}, {pipeline_mode = #tpu.pipeline_mode<synchronous>, transform_indices = @transform_4, window_bounds = array<i64: 1, 32>}, {pipeline_mode = #tpu.pipeline_mode<synchronous>, transform_indices = @transform_5, window_bounds = array<i64: 32, 1>}, {transform_indices = @transform_6, window_bounds = array<i64: 1>}, {transform_indices = @transform_7, window_bounds = array<i64: 16, 32>}, {transform_indices = @transform_8, window_bounds = array<i64: 2, 1, 32>}]} {
    %c0 = arith.constant 0 : index
    %c0_0 = arith.constant 0 : index
    %0 = vector.load %arg1[%c0, %c0_0] : memref<16x32xf32, #tpu.memory_space<vmem>>, vector<16x32xf32>
    %c0_1 = arith.constant 0 : index
    %c0_2 = arith.constant 0 : index
    %1 = vector.load %arg3[%c0_1, %c0_2] : memref<32x96xf32, #tpu.memory_space<vmem>>, vector<32x96xf32>
    %cst = arith.constant dense<0.000000e+00> : vector<16x96xf32>
    %2 = tpu.matmul %0, %1, %cst {dimension_numbers = #tpu.dot_dimension_numbers<[1], [0], [0], [1], [0, 0, 1, 1], [], []>} : vector<16x32xf32>, vector<32x96xf32>, vector<16x96xf32> -> vector<16x96xf32>
    %c0_3 = arith.constant 0 : index
    %c0_4 = arith.constant 0 : index
    %3 = vector.load %arg2[%c0_3, %c0_4] : memref<8x96xf32, #tpu.memory_space<vmem>>, vector<8x96xf32>
    %c0_5 = arith.constant 0 : index
    %c0_6 = arith.constant 0 : index
    %4 = vector.load %arg4[%c0_5, %c0_6] : memref<32x32xf32, #tpu.memory_space<vmem>>, vector<32x32xf32>
    %c0_7 = arith.constant 0 : index
    %c0_8 = arith.constant 0 : index
    %5 = vector.load %arg5[%c0_7, %c0_8] : memref<1x32xf32, #tpu.memory_space<vmem>>, vector<1x32xf32>
    %c0_9 = arith.constant 0 : index
    %c0_10 = arith.constant 0 : index
    %6 = vector.load %arg6[%c0_9, %c0_10] : memref<32x1xf32, #tpu.memory_space<vmem>>, vector<32x1xf32>
    %c0_11 = arith.constant 0 : index
    %7 = memref.load %arg7[%c0_11] : memref<1xf32, #tpu.memory_space<smem>>
    %8 = vector.extract_strided_slice %2 {offsets = [0, 0], sizes = [8, 96], strides = [1, 1]} : vector<16x96xf32> to vector<8x96xf32>
    %9 = arith.addf %8, %3 : vector<8x96xf32>
    %10 = vector.extract_strided_slice %9 {offsets = [0, 0], sizes = [8, 8], strides = [1, 1]} : vector<8x96xf32> to vector<8x8xf32>
    %11 = vector.extract_strided_slice %9 {offsets = [0, 32], sizes = [8, 8], strides = [1, 1]} : vector<8x96xf32> to vector<8x8xf32>
    %12 = vector.extract_strided_slice %9 {offsets = [0, 64], sizes = [8, 8], strides = [1, 1]} : vector<8x96xf32> to vector<8x8xf32>
    %cst_12 = arith.constant dense<0.000000e+00> : vector<8x8xf32>
    %13 = tpu.matmul %10, %11, %cst_12 {dimension_numbers = #tpu.dot_dimension_numbers<[1], [1], [0], [0], [0, 0, 1, 0], [], []>} : vector<8x8xf32>, vector<8x8xf32>, vector<8x8xf32> -> vector<8x8xf32>
    %cst_13 = arith.constant 0.176776692 : f32
    %14 = vector.broadcast %cst_13 : f32 to vector<8x8xf32>
    %15 = arith.mulf %13, %14 : vector<8x8xf32>
    %cst_14 = arith.constant dense<0xFF800000> : vector<8xf32>
    %16 = vector.multi_reduction <maximumf>, %15, %cst_14 [1] : vector<8x8xf32> to vector<8xf32>
    %17 = vector.shape_cast %16 : vector<8xf32> to vector<8x1xf32>
    %18 = vector.broadcast %17 : vector<8x1xf32> to vector<8x8xf32>
    %19 = arith.subf %15, %18 : vector<8x8xf32>
    %20 = math.exp %19 : vector<8x8xf32>
    %cst_15 = arith.constant dense<0.000000e+00> : vector<8xf32>
    %21 = vector.multi_reduction <add>, %20, %cst_15 [1] : vector<8x8xf32> to vector<8xf32>
    %22 = vector.shape_cast %21 : vector<8xf32> to vector<8x1xf32>
    %23 = vector.broadcast %22 : vector<8x1xf32> to vector<8x8xf32>
    %24 = arith.divf %20, %23 : vector<8x8xf32>
    %cst_16 = arith.constant dense<0.000000e+00> : vector<8x8xf32>
    %25 = tpu.matmul %24, %12, %cst_16 {dimension_numbers = #tpu.dot_dimension_numbers<[1], [0], [0], [1], [0, 0, 1, 1], [], []>} : vector<8x8xf32>, vector<8x8xf32>, vector<8x8xf32> -> vector<8x8xf32>
    %26 = vector.extract_strided_slice %4 {offsets = [0, 0], sizes = [8, 32], strides = [1, 1]} : vector<32x32xf32> to vector<8x32xf32>
    %cst_17 = arith.constant dense<0.000000e+00> : vector<8x32xf32>
    %27 = tpu.matmul %25, %26, %cst_17 {dimension_numbers = #tpu.dot_dimension_numbers<[1], [0], [0], [1], [0, 0, 1, 1], [], []>} : vector<8x8xf32>, vector<8x32xf32>, vector<8x32xf32> -> vector<8x32xf32>
    %28 = vector.extract_strided_slice %9 {offsets = [0, 8], sizes = [8, 8], strides = [1, 1]} : vector<8x96xf32> to vector<8x8xf32>
    %29 = vector.extract_strided_slice %9 {offsets = [0, 40], sizes = [8, 8], strides = [1, 1]} : vector<8x96xf32> to vector<8x8xf32>
    %30 = vector.extract_strided_slice %9 {offsets = [0, 72], sizes = [8, 8], strides = [1, 1]} : vector<8x96xf32> to vector<8x8xf32>
    %cst_18 = arith.constant dense<0.000000e+00> : vector<8x8xf32>
    %31 = tpu.matmul %28, %29, %cst_18 {dimension_numbers = #tpu.dot_dimension_numbers<[1], [1], [0], [0], [0, 0, 1, 0], [], []>} : vector<8x8xf32>, vector<8x8xf32>, vector<8x8xf32> -> vector<8x8xf32>
    %cst_19 = arith.constant 0.176776692 : f32
    %32 = vector.broadcast %cst_19 : f32 to vector<8x8xf32>
    %33 = arith.mulf %31, %32 : vector<8x8xf32>
    %cst_20 = arith.constant dense<0xFF800000> : vector<8xf32>
    %34 = vector.multi_reduction <maximumf>, %33, %cst_20 [1] : vector<8x8xf32> to vector<8xf32>
    %35 = vector.shape_cast %34 : vector<8xf32> to vector<8x1xf32>
    %36 = vector.broadcast %35 : vector<8x1xf32> to vector<8x8xf32>
    %37 = arith.subf %33, %36 : vector<8x8xf32>
    %38 = math.exp %37 : vector<8x8xf32>
    %cst_21 = arith.constant dense<0.000000e+00> : vector<8xf32>
    %39 = vector.multi_reduction <add>, %38, %cst_21 [1] : vector<8x8xf32> to vector<8xf32>
    %40 = vector.shape_cast %39 : vector<8xf32> to vector<8x1xf32>
    %41 = vector.broadcast %40 : vector<8x1xf32> to vector<8x8xf32>
    %42 = arith.divf %38, %41 : vector<8x8xf32>
    %cst_22 = arith.constant dense<0.000000e+00> : vector<8x8xf32>
    %43 = tpu.matmul %42, %30, %cst_22 {dimension_numbers = #tpu.dot_dimension_numbers<[1], [0], [0], [1], [0, 0, 1, 1], [], []>} : vector<8x8xf32>, vector<8x8xf32>, vector<8x8xf32> -> vector<8x8xf32>
    %44 = vector.extract_strided_slice %4 {offsets = [8, 0], sizes = [8, 32], strides = [1, 1]} : vector<32x32xf32> to vector<8x32xf32>
    %cst_23 = arith.constant dense<0.000000e+00> : vector<8x32xf32>
    %45 = tpu.matmul %43, %44, %cst_23 {dimension_numbers = #tpu.dot_dimension_numbers<[1], [0], [0], [1], [0, 0, 1, 1], [], []>} : vector<8x8xf32>, vector<8x32xf32>, vector<8x32xf32> -> vector<8x32xf32>
    %46 = arith.addf %27, %45 : vector<8x32xf32>
    %47 = vector.extract_strided_slice %9 {offsets = [0, 16], sizes = [8, 8], strides = [1, 1]} : vector<8x96xf32> to vector<8x8xf32>
    %48 = vector.extract_strided_slice %9 {offsets = [0, 48], sizes = [8, 8], strides = [1, 1]} : vector<8x96xf32> to vector<8x8xf32>
    %49 = vector.extract_strided_slice %9 {offsets = [0, 80], sizes = [8, 8], strides = [1, 1]} : vector<8x96xf32> to vector<8x8xf32>
    %cst_24 = arith.constant dense<0.000000e+00> : vector<8x8xf32>
    %50 = tpu.matmul %47, %48, %cst_24 {dimension_numbers = #tpu.dot_dimension_numbers<[1], [1], [0], [0], [0, 0, 1, 0], [], []>} : vector<8x8xf32>, vector<8x8xf32>, vector<8x8xf32> -> vector<8x8xf32>
    %cst_25 = arith.constant 0.176776692 : f32
    %51 = vector.broadcast %cst_25 : f32 to vector<8x8xf32>
    %52 = arith.mulf %50, %51 : vector<8x8xf32>
    %cst_26 = arith.constant dense<0xFF800000> : vector<8xf32>
    %53 = vector.multi_reduction <maximumf>, %52, %cst_26 [1] : vector<8x8xf32> to vector<8xf32>
    %54 = vector.shape_cast %53 : vector<8xf32> to vector<8x1xf32>
    %55 = vector.broadcast %54 : vector<8x1xf32> to vector<8x8xf32>
    %56 = arith.subf %52, %55 : vector<8x8xf32>
    %57 = math.exp %56 : vector<8x8xf32>
    %cst_27 = arith.constant dense<0.000000e+00> : vector<8xf32>
    %58 = vector.multi_reduction <add>, %57, %cst_27 [1] : vector<8x8xf32> to vector<8xf32>
    %59 = vector.shape_cast %58 : vector<8xf32> to vector<8x1xf32>
    %60 = vector.broadcast %59 : vector<8x1xf32> to vector<8x8xf32>
    %61 = arith.divf %57, %60 : vector<8x8xf32>
    %cst_28 = arith.constant dense<0.000000e+00> : vector<8x8xf32>
    %62 = tpu.matmul %61, %49, %cst_28 {dimension_numbers = #tpu.dot_dimension_numbers<[1], [0], [0], [1], [0, 0, 1, 1], [], []>} : vector<8x8xf32>, vector<8x8xf32>, vector<8x8xf32> -> vector<8x8xf32>
    %63 = vector.extract_strided_slice %4 {offsets = [16, 0], sizes = [8, 32], strides = [1, 1]} : vector<32x32xf32> to vector<8x32xf32>
    %cst_29 = arith.constant dense<0.000000e+00> : vector<8x32xf32>
    %64 = tpu.matmul %62, %63, %cst_29 {dimension_numbers = #tpu.dot_dimension_numbers<[1], [0], [0], [1], [0, 0, 1, 1], [], []>} : vector<8x8xf32>, vector<8x32xf32>, vector<8x32xf32> -> vector<8x32xf32>
    %65 = arith.addf %46, %64 : vector<8x32xf32>
    %66 = vector.extract_strided_slice %9 {offsets = [0, 24], sizes = [8, 8], strides = [1, 1]} : vector<8x96xf32> to vector<8x8xf32>
    %67 = vector.extract_strided_slice %9 {offsets = [0, 56], sizes = [8, 8], strides = [1, 1]} : vector<8x96xf32> to vector<8x8xf32>
    %68 = vector.extract_strided_slice %9 {offsets = [0, 88], sizes = [8, 8], strides = [1, 1]} : vector<8x96xf32> to vector<8x8xf32>
    %cst_30 = arith.constant dense<0.000000e+00> : vector<8x8xf32>
    %69 = tpu.matmul %66, %67, %cst_30 {dimension_numbers = #tpu.dot_dimension_numbers<[1], [1], [0], [0], [0, 0, 1, 0], [], []>} : vector<8x8xf32>, vector<8x8xf32>, vector<8x8xf32> -> vector<8x8xf32>
    %cst_31 = arith.constant 0.176776692 : f32
    %70 = vector.broadcast %cst_31 : f32 to vector<8x8xf32>
    %71 = arith.mulf %69, %70 : vector<8x8xf32>
    %cst_32 = arith.constant dense<0xFF800000> : vector<8xf32>
    %72 = vector.multi_reduction <maximumf>, %71, %cst_32 [1] : vector<8x8xf32> to vector<8xf32>
    %73 = vector.shape_cast %72 : vector<8xf32> to vector<8x1xf32>
    %74 = vector.broadcast %73 : vector<8x1xf32> to vector<8x8xf32>
    %75 = arith.subf %71, %74 : vector<8x8xf32>
    %76 = math.exp %75 : vector<8x8xf32>
    %cst_33 = arith.constant dense<0.000000e+00> : vector<8xf32>
    %77 = vector.multi_reduction <add>, %76, %cst_33 [1] : vector<8x8xf32> to vector<8xf32>
    %78 = vector.shape_cast %77 : vector<8xf32> to vector<8x1xf32>
    %79 = vector.broadcast %78 : vector<8x1xf32> to vector<8x8xf32>
    %80 = arith.divf %76, %79 : vector<8x8xf32>
    %cst_34 = arith.constant dense<0.000000e+00> : vector<8x8xf32>
    %81 = tpu.matmul %80, %68, %cst_34 {dimension_numbers = #tpu.dot_dimension_numbers<[1], [0], [0], [1], [0, 0, 1, 1], [], []>} : vector<8x8xf32>, vector<8x8xf32>, vector<8x8xf32> -> vector<8x8xf32>
    %82 = vector.extract_strided_slice %4 {offsets = [24, 0], sizes = [8, 32], strides = [1, 1]} : vector<32x32xf32> to vector<8x32xf32>
    %cst_35 = arith.constant dense<0.000000e+00> : vector<8x32xf32>
    %83 = tpu.matmul %81, %82, %cst_35 {dimension_numbers = #tpu.dot_dimension_numbers<[1], [0], [0], [1], [0, 0, 1, 1], [], []>} : vector<8x8xf32>, vector<8x32xf32>, vector<8x32xf32> -> vector<8x32xf32>
    %84 = arith.addf %65, %83 : vector<8x32xf32>
    %85 = vector.broadcast %5 : vector<1x32xf32> to vector<8x32xf32>
    %86 = arith.addf %84, %85 : vector<8x32xf32>
    %cst_36 = arith.constant 0.000000e+00 : f32
    %87 = vector.broadcast %cst_36 : f32 to vector<8x32xf32>
    %88 = arith.maximumf %86, %87 : vector<8x32xf32>
    %cst_37 = arith.constant dense<0.000000e+00> : vector<8x1xf32>
    %89 = tpu.matmul %88, %6, %cst_37 {dimension_numbers = #tpu.dot_dimension_numbers<[1], [0], [0], [1], [0, 0, 1, 1], [], []>} : vector<8x32xf32>, vector<32x1xf32>, vector<8x1xf32> -> vector<8x1xf32>
    %90 = vector.broadcast %7 : f32 to vector<8x1xf32>
    %91 = arith.addf %89, %90 : vector<8x1xf32>
    %cst_38 = arith.constant dense<0xFF800000> : vector<1xf32>
    %92 = vector.multi_reduction <maximumf>, %91, %cst_38 [0] : vector<8x1xf32> to vector<1xf32>
    %93 = vector.shape_cast %92 : vector<1xf32> to vector<1x1xf32>
    %94 = vector.broadcast %93 : vector<1x1xf32> to vector<8x1xf32>
    %95 = arith.subf %91, %94 : vector<8x1xf32>
    %96 = math.exp %95 : vector<8x1xf32>
    %cst_39 = arith.constant dense<0.000000e+00> : vector<1xf32>
    %97 = vector.multi_reduction <add>, %96, %cst_39 [0] : vector<8x1xf32> to vector<1xf32>
    %98 = vector.shape_cast %97 : vector<1xf32> to vector<1x1xf32>
    %99 = vector.broadcast %98 : vector<1x1xf32> to vector<8x1xf32>
    %100 = arith.divf %96, %99 : vector<8x1xf32>
    %cst_40 = arith.constant dense<0.000000e+00> : vector<1x32xf32>
    %101 = tpu.matmul %100, %88, %cst_40 {dimension_numbers = #tpu.dot_dimension_numbers<[0], [0], [1], [1], [0, 1, 1, 1], [], []>} : vector<8x1xf32>, vector<8x32xf32>, vector<1x32xf32> -> vector<1x32xf32>
    %102 = vector.extract_strided_slice %2 {offsets = [8, 0], sizes = [8, 96], strides = [1, 1]} : vector<16x96xf32> to vector<8x96xf32>
    %103 = arith.addf %102, %3 : vector<8x96xf32>
    %104 = vector.extract_strided_slice %103 {offsets = [0, 0], sizes = [8, 8], strides = [1, 1]} : vector<8x96xf32> to vector<8x8xf32>
    %105 = vector.extract_strided_slice %103 {offsets = [0, 32], sizes = [8, 8], strides = [1, 1]} : vector<8x96xf32> to vector<8x8xf32>
    %106 = vector.extract_strided_slice %103 {offsets = [0, 64], sizes = [8, 8], strides = [1, 1]} : vector<8x96xf32> to vector<8x8xf32>
    %cst_41 = arith.constant dense<0.000000e+00> : vector<8x8xf32>
    %107 = tpu.matmul %104, %105, %cst_41 {dimension_numbers = #tpu.dot_dimension_numbers<[1], [1], [0], [0], [0, 0, 1, 0], [], []>} : vector<8x8xf32>, vector<8x8xf32>, vector<8x8xf32> -> vector<8x8xf32>
    %cst_42 = arith.constant 0.176776692 : f32
    %108 = vector.broadcast %cst_42 : f32 to vector<8x8xf32>
    %109 = arith.mulf %107, %108 : vector<8x8xf32>
    %cst_43 = arith.constant dense<0xFF800000> : vector<8xf32>
    %110 = vector.multi_reduction <maximumf>, %109, %cst_43 [1] : vector<8x8xf32> to vector<8xf32>
    %111 = vector.shape_cast %110 : vector<8xf32> to vector<8x1xf32>
    %112 = vector.broadcast %111 : vector<8x1xf32> to vector<8x8xf32>
    %113 = arith.subf %109, %112 : vector<8x8xf32>
    %114 = math.exp %113 : vector<8x8xf32>
    %cst_44 = arith.constant dense<0.000000e+00> : vector<8xf32>
    %115 = vector.multi_reduction <add>, %114, %cst_44 [1] : vector<8x8xf32> to vector<8xf32>
    %116 = vector.shape_cast %115 : vector<8xf32> to vector<8x1xf32>
    %117 = vector.broadcast %116 : vector<8x1xf32> to vector<8x8xf32>
    %118 = arith.divf %114, %117 : vector<8x8xf32>
    %cst_45 = arith.constant dense<0.000000e+00> : vector<8x8xf32>
    %119 = tpu.matmul %118, %106, %cst_45 {dimension_numbers = #tpu.dot_dimension_numbers<[1], [0], [0], [1], [0, 0, 1, 1], [], []>} : vector<8x8xf32>, vector<8x8xf32>, vector<8x8xf32> -> vector<8x8xf32>
    %120 = vector.extract_strided_slice %4 {offsets = [0, 0], sizes = [8, 32], strides = [1, 1]} : vector<32x32xf32> to vector<8x32xf32>
    %cst_46 = arith.constant dense<0.000000e+00> : vector<8x32xf32>
    %121 = tpu.matmul %119, %120, %cst_46 {dimension_numbers = #tpu.dot_dimension_numbers<[1], [0], [0], [1], [0, 0, 1, 1], [], []>} : vector<8x8xf32>, vector<8x32xf32>, vector<8x32xf32> -> vector<8x32xf32>
    %122 = vector.extract_strided_slice %103 {offsets = [0, 8], sizes = [8, 8], strides = [1, 1]} : vector<8x96xf32> to vector<8x8xf32>
    %123 = vector.extract_strided_slice %103 {offsets = [0, 40], sizes = [8, 8], strides = [1, 1]} : vector<8x96xf32> to vector<8x8xf32>
    %124 = vector.extract_strided_slice %103 {offsets = [0, 72], sizes = [8, 8], strides = [1, 1]} : vector<8x96xf32> to vector<8x8xf32>
    %cst_47 = arith.constant dense<0.000000e+00> : vector<8x8xf32>
    %125 = tpu.matmul %122, %123, %cst_47 {dimension_numbers = #tpu.dot_dimension_numbers<[1], [1], [0], [0], [0, 0, 1, 0], [], []>} : vector<8x8xf32>, vector<8x8xf32>, vector<8x8xf32> -> vector<8x8xf32>
    %cst_48 = arith.constant 0.176776692 : f32
    %126 = vector.broadcast %cst_48 : f32 to vector<8x8xf32>
    %127 = arith.mulf %125, %126 : vector<8x8xf32>
    %cst_49 = arith.constant dense<0xFF800000> : vector<8xf32>
    %128 = vector.multi_reduction <maximumf>, %127, %cst_49 [1] : vector<8x8xf32> to vector<8xf32>
    %129 = vector.shape_cast %128 : vector<8xf32> to vector<8x1xf32>
    %130 = vector.broadcast %129 : vector<8x1xf32> to vector<8x8xf32>
    %131 = arith.subf %127, %130 : vector<8x8xf32>
    %132 = math.exp %131 : vector<8x8xf32>
    %cst_50 = arith.constant dense<0.000000e+00> : vector<8xf32>
    %133 = vector.multi_reduction <add>, %132, %cst_50 [1] : vector<8x8xf32> to vector<8xf32>
    %134 = vector.shape_cast %133 : vector<8xf32> to vector<8x1xf32>
    %135 = vector.broadcast %134 : vector<8x1xf32> to vector<8x8xf32>
    %136 = arith.divf %132, %135 : vector<8x8xf32>
    %cst_51 = arith.constant dense<0.000000e+00> : vector<8x8xf32>
    %137 = tpu.matmul %136, %124, %cst_51 {dimension_numbers = #tpu.dot_dimension_numbers<[1], [0], [0], [1], [0, 0, 1, 1], [], []>} : vector<8x8xf32>, vector<8x8xf32>, vector<8x8xf32> -> vector<8x8xf32>
    %138 = vector.extract_strided_slice %4 {offsets = [8, 0], sizes = [8, 32], strides = [1, 1]} : vector<32x32xf32> to vector<8x32xf32>
    %cst_52 = arith.constant dense<0.000000e+00> : vector<8x32xf32>
    %139 = tpu.matmul %137, %138, %cst_52 {dimension_numbers = #tpu.dot_dimension_numbers<[1], [0], [0], [1], [0, 0, 1, 1], [], []>} : vector<8x8xf32>, vector<8x32xf32>, vector<8x32xf32> -> vector<8x32xf32>
    %140 = arith.addf %121, %139 : vector<8x32xf32>
    %141 = vector.extract_strided_slice %103 {offsets = [0, 16], sizes = [8, 8], strides = [1, 1]} : vector<8x96xf32> to vector<8x8xf32>
    %142 = vector.extract_strided_slice %103 {offsets = [0, 48], sizes = [8, 8], strides = [1, 1]} : vector<8x96xf32> to vector<8x8xf32>
    %143 = vector.extract_strided_slice %103 {offsets = [0, 80], sizes = [8, 8], strides = [1, 1]} : vector<8x96xf32> to vector<8x8xf32>
    %cst_53 = arith.constant dense<0.000000e+00> : vector<8x8xf32>
    %144 = tpu.matmul %141, %142, %cst_53 {dimension_numbers = #tpu.dot_dimension_numbers<[1], [1], [0], [0], [0, 0, 1, 0], [], []>} : vector<8x8xf32>, vector<8x8xf32>, vector<8x8xf32> -> vector<8x8xf32>
    %cst_54 = arith.constant 0.176776692 : f32
    %145 = vector.broadcast %cst_54 : f32 to vector<8x8xf32>
    %146 = arith.mulf %144, %145 : vector<8x8xf32>
    %cst_55 = arith.constant dense<0xFF800000> : vector<8xf32>
    %147 = vector.multi_reduction <maximumf>, %146, %cst_55 [1] : vector<8x8xf32> to vector<8xf32>
    %148 = vector.shape_cast %147 : vector<8xf32> to vector<8x1xf32>
    %149 = vector.broadcast %148 : vector<8x1xf32> to vector<8x8xf32>
    %150 = arith.subf %146, %149 : vector<8x8xf32>
    %151 = math.exp %150 : vector<8x8xf32>
    %cst_56 = arith.constant dense<0.000000e+00> : vector<8xf32>
    %152 = vector.multi_reduction <add>, %151, %cst_56 [1] : vector<8x8xf32> to vector<8xf32>
    %153 = vector.shape_cast %152 : vector<8xf32> to vector<8x1xf32>
    %154 = vector.broadcast %153 : vector<8x1xf32> to vector<8x8xf32>
    %155 = arith.divf %151, %154 : vector<8x8xf32>
    %cst_57 = arith.constant dense<0.000000e+00> : vector<8x8xf32>
    %156 = tpu.matmul %155, %143, %cst_57 {dimension_numbers = #tpu.dot_dimension_numbers<[1], [0], [0], [1], [0, 0, 1, 1], [], []>} : vector<8x8xf32>, vector<8x8xf32>, vector<8x8xf32> -> vector<8x8xf32>
    %157 = vector.extract_strided_slice %4 {offsets = [16, 0], sizes = [8, 32], strides = [1, 1]} : vector<32x32xf32> to vector<8x32xf32>
    %cst_58 = arith.constant dense<0.000000e+00> : vector<8x32xf32>
    %158 = tpu.matmul %156, %157, %cst_58 {dimension_numbers = #tpu.dot_dimension_numbers<[1], [0], [0], [1], [0, 0, 1, 1], [], []>} : vector<8x8xf32>, vector<8x32xf32>, vector<8x32xf32> -> vector<8x32xf32>
    %159 = arith.addf %140, %158 : vector<8x32xf32>
    %160 = vector.extract_strided_slice %103 {offsets = [0, 24], sizes = [8, 8], strides = [1, 1]} : vector<8x96xf32> to vector<8x8xf32>
    %161 = vector.extract_strided_slice %103 {offsets = [0, 56], sizes = [8, 8], strides = [1, 1]} : vector<8x96xf32> to vector<8x8xf32>
    %162 = vector.extract_strided_slice %103 {offsets = [0, 88], sizes = [8, 8], strides = [1, 1]} : vector<8x96xf32> to vector<8x8xf32>
    %cst_59 = arith.constant dense<0.000000e+00> : vector<8x8xf32>
    %163 = tpu.matmul %160, %161, %cst_59 {dimension_numbers = #tpu.dot_dimension_numbers<[1], [1], [0], [0], [0, 0, 1, 0], [], []>} : vector<8x8xf32>, vector<8x8xf32>, vector<8x8xf32> -> vector<8x8xf32>
    %cst_60 = arith.constant 0.176776692 : f32
    %164 = vector.broadcast %cst_60 : f32 to vector<8x8xf32>
    %165 = arith.mulf %163, %164 : vector<8x8xf32>
    %cst_61 = arith.constant dense<0xFF800000> : vector<8xf32>
    %166 = vector.multi_reduction <maximumf>, %165, %cst_61 [1] : vector<8x8xf32> to vector<8xf32>
    %167 = vector.shape_cast %166 : vector<8xf32> to vector<8x1xf32>
    %168 = vector.broadcast %167 : vector<8x1xf32> to vector<8x8xf32>
    %169 = arith.subf %165, %168 : vector<8x8xf32>
    %170 = math.exp %169 : vector<8x8xf32>
    %cst_62 = arith.constant dense<0.000000e+00> : vector<8xf32>
    %171 = vector.multi_reduction <add>, %170, %cst_62 [1] : vector<8x8xf32> to vector<8xf32>
    %172 = vector.shape_cast %171 : vector<8xf32> to vector<8x1xf32>
    %173 = vector.broadcast %172 : vector<8x1xf32> to vector<8x8xf32>
    %174 = arith.divf %170, %173 : vector<8x8xf32>
    %cst_63 = arith.constant dense<0.000000e+00> : vector<8x8xf32>
    %175 = tpu.matmul %174, %162, %cst_63 {dimension_numbers = #tpu.dot_dimension_numbers<[1], [0], [0], [1], [0, 0, 1, 1], [], []>} : vector<8x8xf32>, vector<8x8xf32>, vector<8x8xf32> -> vector<8x8xf32>
    %176 = vector.extract_strided_slice %4 {offsets = [24, 0], sizes = [8, 32], strides = [1, 1]} : vector<32x32xf32> to vector<8x32xf32>
    %cst_64 = arith.constant dense<0.000000e+00> : vector<8x32xf32>
    %177 = tpu.matmul %175, %176, %cst_64 {dimension_numbers = #tpu.dot_dimension_numbers<[1], [0], [0], [1], [0, 0, 1, 1], [], []>} : vector<8x8xf32>, vector<8x32xf32>, vector<8x32xf32> -> vector<8x32xf32>
    %178 = arith.addf %159, %177 : vector<8x32xf32>
    %179 = vector.broadcast %5 : vector<1x32xf32> to vector<8x32xf32>
    %180 = arith.addf %178, %179 : vector<8x32xf32>
    %cst_65 = arith.constant 0.000000e+00 : f32
    %181 = vector.broadcast %cst_65 : f32 to vector<8x32xf32>
    %182 = arith.maximumf %180, %181 : vector<8x32xf32>
    %cst_66 = arith.constant dense<0.000000e+00> : vector<8x1xf32>
    %183 = tpu.matmul %182, %6, %cst_66 {dimension_numbers = #tpu.dot_dimension_numbers<[1], [0], [0], [1], [0, 0, 1, 1], [], []>} : vector<8x32xf32>, vector<32x1xf32>, vector<8x1xf32> -> vector<8x1xf32>
    %184 = vector.broadcast %7 : f32 to vector<8x1xf32>
    %185 = arith.addf %183, %184 : vector<8x1xf32>
    %cst_67 = arith.constant dense<0xFF800000> : vector<1xf32>
    %186 = vector.multi_reduction <maximumf>, %185, %cst_67 [0] : vector<8x1xf32> to vector<1xf32>
    %187 = vector.shape_cast %186 : vector<1xf32> to vector<1x1xf32>
    %188 = vector.broadcast %187 : vector<1x1xf32> to vector<8x1xf32>
    %189 = arith.subf %185, %188 : vector<8x1xf32>
    %190 = math.exp %189 : vector<8x1xf32>
    %cst_68 = arith.constant dense<0.000000e+00> : vector<1xf32>
    %191 = vector.multi_reduction <add>, %190, %cst_68 [0] : vector<8x1xf32> to vector<1xf32>
    %192 = vector.shape_cast %191 : vector<1xf32> to vector<1x1xf32>
    %193 = vector.broadcast %192 : vector<1x1xf32> to vector<8x1xf32>
    %194 = arith.divf %190, %193 : vector<8x1xf32>
    %cst_69 = arith.constant dense<0.000000e+00> : vector<1x32xf32>
    %195 = tpu.matmul %194, %182, %cst_69 {dimension_numbers = #tpu.dot_dimension_numbers<[0], [0], [1], [1], [0, 1, 1, 1], [], []>} : vector<8x1xf32>, vector<8x32xf32>, vector<1x32xf32> -> vector<1x32xf32>
    %196 = tpu.concatenate %88, %182 in 0 : vector<8x32xf32>, vector<8x32xf32> -> vector<16x32xf32>
    %c0_70 = arith.constant 0 : index
    %c0_71 = arith.constant 0 : index
    %197 = vector.load %arg8[%c0_70, %c0_71] : memref<16x32xf32, #tpu.memory_space<vmem>>, vector<16x32xf32>
    tpu.vector_store %arg8[%c0_70, %c0_71], %196 {strides = array<i32>} : memref<16x32xf32, #tpu.memory_space<vmem>>, vector<16x32xf32>,
    %198 = vector.shape_cast %101 : vector<1x32xf32> to vector<1x1x32xf32>
    %199 = vector.shape_cast %195 : vector<1x32xf32> to vector<1x1x32xf32>
    %200 = tpu.concatenate %198, %199 in 0 : vector<1x1x32xf32>, vector<1x1x32xf32> -> vector<2x1x32xf32>
    %c0_72 = arith.constant 0 : index
    %c0_73 = arith.constant 0 : index
    %c0_74 = arith.constant 0 : index
    %201 = vector.load %arg9[%c0_72, %c0_73, %c0_74] : memref<2x1x32xf32, #tpu.memory_space<vmem>>, vector<2x1x32xf32>
    tpu.vector_store %arg9[%c0_72, %c0_73, %c0_74], %200 {strides = array<i32>} : memref<2x1x32xf32, #tpu.memory_space<vmem>>, vector<2x1x32xf32>,
    return
  }
  func.func @transform_0(%arg0: i32) -> (i32, i32) {
    %c0_i32 = arith.constant 0 : i32
    %c0_i32_0 = arith.constant 0 : i32
    return %arg0, %c0_i32 : i32, i32
  }
  func.func @transform_1(%arg0: i32) -> (i32, i32) {
    %c0_i32 = arith.constant 0 : i32
    %c0_i32_0 = arith.constant 0 : i32
    %c0_i32_1 = arith.constant 0 : i32
    return %c0_i32, %c0_i32_0 : i32, i32
  }
  func.func @transform_2(%arg0: i32) -> (i32, i32) {
    %c0_i32 = arith.constant 0 : i32
    %c0_i32_0 = arith.constant 0 : i32
    %c0_i32_1 = arith.constant 0 : i32
    return %c0_i32, %c0_i32_0 : i32, i32
  }
  func.func @transform_3(%arg0: i32) -> (i32, i32) {
    %c0_i32 = arith.constant 0 : i32
    %c0_i32_0 = arith.constant 0 : i32
    %c0_i32_1 = arith.constant 0 : i32
    return %c0_i32, %c0_i32_0 : i32, i32
  }
  func.func @transform_4(%arg0: i32) -> (i32, i32) {
    %c0_i32 = arith.constant 0 : i32
    %c0_i32_0 = arith.constant 0 : i32
    %c0_i32_1 = arith.constant 0 : i32
    return %c0_i32, %c0_i32_0 : i32, i32
  }
  func.func @transform_5(%arg0: i32) -> (i32, i32) {
    %c0_i32 = arith.constant 0 : i32
    %c0_i32_0 = arith.constant 0 : i32
    %c0_i32_1 = arith.constant 0 : i32
    return %c0_i32, %c0_i32_0 : i32, i32
  }
  func.func @transform_6(%arg0: i32) -> i32 {
    %c0_i32 = arith.constant 0 : i32
    %c0_i32_0 = arith.constant 0 : i32
    return %c0_i32 : i32
  }
  func.func @transform_7(%arg0: i32) -> (i32, i32) {
    %c0_i32 = arith.constant 0 : i32
    %c0_i32_0 = arith.constant 0 : i32
    return %arg0, %c0_i32 : i32, i32
  }
  func.func @transform_8(%arg0: i32) -> (i32, i32, i32) {
    %c0_i32 = arith.constant 0 : i32
    %c0_i32_0 = arith.constant 0 : i32
    %c0_i32_1 = arith.constant 0 : i32
    return %arg0, %c0_i32, %c0_i32_0 : i32, i32, i32
  }
}

</mosaic_0001>

<llo_original>
// kernel: tpu_custom_call.1
$region0: #{tpu_custom_call.1}
  #allocation0 [shape = 'u32[]', space=smem, size = 0x4, offset = 0x4, fixed_abs, tag = 'smem constant byte address 0x4 - core index']
  #allocation1 [shape = 'u32[144,128]{1,0:T(1,128)}', space=vmem, size = 0x12000, scoped, tag = 'internal scratch']
  #allocation2 [shape = 'f32[1]{0:T(128)S(6)}', space=smem, size = 0x200, scoped, tag = 'scoped memory for tpu_custom_call.1']
  %s0 = inlined_call_operand.hbm [shape: f32[16,32], index: 0, kind: input, shape index: {}]
  %s1 = inlined_call_operand.vmem [shape: f32[8,96], index: 1, kind: input, shape index: {}]
  %s2 = inlined_call_operand.vmem [shape: f32[32,96], index: 2, kind: input, shape index: {}]
  %s3 = inlined_call_operand.hbm [shape: f32[32,32], index: 3, kind: input, shape index: {}]
  %s4 = inlined_call_operand.vmem [shape: f32[1,32], index: 4, kind: input, shape index: {}]
  %s5 = inlined_call_operand.vmem [shape: f32[32,1], index: 5, kind: input, shape index: {}]
  %s6 = inlined_call_operand.<no memory space> [shape: f32[1], index: 6, kind: input, shape index: {}]
  %s7 = inlined_call_operand.hbm [shape: f32[16,32], index: 7, kind: output, shape index: {0}]
  %s8 = inlined_call_operand.hbm [shape: f32[2,1,32], index: 8, kind: output, shape index: {1}]
  %9 = xla_tuple %s7, %s8
  %s10 = sld [smem:[#allocation0]]
  $region54: #{tpu_custom_call.1} parent=0
    _
  %s12 = ssub.s32 1, %s10
  %s13 = scalar_select 0, %s12, %s10
  %14 = sst [smem:[#allocation2]] %s6
  $region1: #{tpu_custom_call.1} parent=0
    #allocation3 [shape = 'u8[8192]{0}', space=vmem, size = 0x2000, scoped, tag = 'input window, operand 0, single buffered']
    #allocation4 [shape = 's32[1]{0}', space=sflag, size = 0x4, scoped, tag = 'scoped memory for tpu_custom_call.1']
    #allocation5 [shape = 's32[1]{0}', space=sflag, size = 0x4, scoped, tag = 'scoped memory for tpu_custom_call.1']
    #allocation6 [shape = 'u8[16384]{0}', space=vmem, size = 0x4000, scoped, tag = 'input window, operand 3, single buffered']
    #allocation7 [shape = 's32[1]{0}', space=sflag, size = 0x4, scoped, tag = 'scoped memory for tpu_custom_call.1']
    #allocation8 [shape = 'u8[8192]{0}', space=vmem, size = 0x2000, scoped, tag = 'output window, operand 0, single buffered']
    #allocation9 [shape = 'u8[1024]{0}', space=vmem, size = 0x400, scoped, tag = 'output window, operand 1, single buffered']
    #allocation10 [shape = 's32[1]{0}', space=sflag, size = 0x4, scoped, tag = 'scoped memory for tpu_custom_call.1']
    %15 = vsyncpa [#allocation4], 0
    %16 = vsyncpa [#allocation7], 0
    %17 = vsyncpa [#allocation5], 0
    %18 = vsyncpa [#allocation10], 0
    // Predicated region
    $region2: #{tpu_custom_call.1} parent=1 // pred_check
      _
    $region3: #{tpu_custom_call.1} parent=1 // pred_check_branch
      %20 = sbr.rel (0) target = $region5
    $region4: #{tpu_custom_call.1} parent=1 // pred_region
      %s22 = ssub.s32 256, 256
      %23 = vsyncadd [#allocation4], %s22
      %s24 = sshll.u32 [#allocation3], 4
      %s25 = int_to_ptr.vmem [resolvable:$true] %s24
      %30 = dma.hbm_to_vmem [thread:$0]  %s0, 256, %s25, [#allocation4], 128, 128, 8
    $region5: #{tpu_custom_call.1} parent=1 // pred_fallthru
      _
    // Predicated region
    $region6: #{tpu_custom_call.1} parent=1 // pred_check
      _
    $region7: #{tpu_custom_call.1} parent=1 // pred_check_branch
      %32 = sbr.rel (0) target = $region9
    $region8: #{tpu_custom_call.1} parent=1 // pred_region
      _
    $region9: #{tpu_custom_call.1} parent=1 // pred_fallthru
      _
    // Predicated region
    $region10: #{tpu_custom_call.1} parent=1 // pred_check
      _
    $region11: #{tpu_custom_call.1} parent=1 // pred_check_branch
      %34 = sbr.rel (0) target = $region13
    $region12: #{tpu_custom_call.1} parent=1 // pred_region
      _
    $region13: #{tpu_custom_call.1} parent=1 // pred_fallthru
      _
    // Predicated region
    $region14: #{tpu_custom_call.1} parent=1 // pred_check
      _
    $region15: #{tpu_custom_call.1} parent=1 // pred_check_branch
      %36 = sbr.rel (0) target = $region17
    $region16: #{tpu_custom_call.1} parent=1 // pred_region
      %s38 = ssub.s32 512, 512
      %39 = vsyncadd [#allocation7], %s38
      %s40 = sshll.u32 [#allocation6], 4
      %s41 = int_to_ptr.vmem [resolvable:$true] %s40
      %46 = dma.hbm_to_vmem [thread:$0]  %s3, 512, %s41, [#allocation7], 128, 128, 8
    $region17: #{tpu_custom_call.1} parent=1 // pred_fallthru
      _
    // Predicated region
    $region18: #{tpu_custom_call.1} parent=1 // pred_check
      _
    $region19: #{tpu_custom_call.1} parent=1 // pred_check_branch
      %48 = sbr.rel (0) target = $region21
    $region20: #{tpu_custom_call.1} parent=1 // pred_region
      _
    $region21: #{tpu_custom_call.1} parent=1 // pred_fallthru
      _
    // Predicated region
    $region22: #{tpu_custom_call.1} parent=1 // pred_check
      _
    $region23: #{tpu_custom_call.1} parent=1 // pred_check_branch
      %50 = sbr.rel (0) target = $region25
    $region24: #{tpu_custom_call.1} parent=1 // pred_region
      _
    $region25: #{tpu_custom_call.1} parent=1 // pred_fallthru
      _
    // Predicated region
    $region26: #{tpu_custom_call.1} parent=1 // pred_check
      _
    $region27: #{tpu_custom_call.1} parent=1 // pred_check_branch
      %52 = sbr.rel (0) target = $region29
    $region28: #{tpu_custom_call.1} parent=1 // pred_region
      _
    $region29: #{tpu_custom_call.1} parent=1 // pred_fallthru
      _
    // Predicated region
    $region30: #{tpu_custom_call.1} parent=1 // pred_check
      _
    $region31: #{tpu_custom_call.1} parent=1 // pred_check_branch
      %54 = sbr.rel (0) target = $region33
    $region32: #{tpu_custom_call.1} parent=1 // pred_region
      %55 = dma.done [#allocation4], 256
    $region33: #{tpu_custom_call.1} parent=1 // pred_fallthru
      _
    // Predicated region
    $region34: #{tpu_custom_call.1} parent=1 // pred_check
      _
    $region35: #{tpu_custom_call.1} parent=1 // pred_check_branch
      %57 = sbr.rel (0) target = $region37
    $region36: #{tpu_custom_call.1} parent=1 // pred_region
      %58 = dma.done [#allocation7], 512
    $region37: #{tpu_custom_call.1} parent=1 // pred_fallthru
      _
    %v59 = vld [vmem:[#allocation3] sm:$0xff]
    %v60 = vld [vmem:[#allocation3 + $0x8] sm:$0xff]
    %v61 = vld [vmem:[%s2] sm:$0xff]
    %v62 = vld [vmem:[%s2 + $0x8] sm:$0xff]
    %v63 = vld [vmem:[%s2 + $0x10] sm:$0xff]
    %v64 = vld [vmem:[%s2 + $0x18] sm:$0xff]
    %vm65 = vcmask 261120
    %v67 = vsel %vm65, %v59, 0
    %v70 = vsel %vm65, %v60, 0
    %72 = vmatprep.subr.mxu0 0.0
    %73 = vmatpush1.msra.mxu0 %v61
    %74 = vmatprep.subr.mxu0 0.0
    %75 = vmatpush1.msra.mxu0 %v62
    %76 = vmatprep.subr.mxu0 0.0
    %77 = vmatpush1.msra.mxu0 %v63
    %78 = vmatprep.subr.mxu0 0.0
    %79 = vmatpush1.msra.mxu0 %v64
    %80 = vmatprep.subr.mxu0 0.0
    %81 = vmatpush1.msra.mxu0 0.0
    %82 = vmatprep.subr.mxu0 0.0
    %83 = vmatpush1.msra.mxu0 0.0
    %84 = vmatprep.subr.mxu0 0.0
    %85 = vmatpush1.msra.mxu0 0.0
    %86 = vmatprep.subr.mxu0 0.0
    %87 = vmatpush1.msra.mxu0 0.0
    %88 = vmatprep.subr.mxu0 0.0
    %89 = vmatpush1.msra.mxu0 0.0
    %90 = vmatprep.subr.mxu0 0.0
    %91 = vmatpush1.msra.mxu0 0.0
    %92 = vmatprep.subr.mxu0 0.0
    %93 = vmatpush1.msra.mxu0 0.0
    %94 = vmatprep.subr.mxu0 0.0
    %95 = vmatpush1.msra.mxu0 0.0
    %96 = vmatprep.subr.mxu0 0.0
    %97 = vmatpush1.msra.mxu0 0.0
    %98 = vmatprep.subr.mxu0 0.0
    %99 = vmatpush1.msra.mxu0 0.0
    %100 = vmatprep.subr.mxu0 0.0
    %101 = vmatpush1.msra.mxu0 0.0
    %102 = vmatprep.subr.mxu0 0.0
    %103 = vmatpush1.msra.mxu0 0.0
    %104 = vmatprep.subr.mxu0 0.0
    %105 = vmatpush1.msra.mxu0 0.0
    %106 = vmatprep.subr.mxu0 0.0
    %107 = vmatpush1.msra.mxu0 0.0
    %108 = vmatprep.subr.mxu0 0.0
    %109 = vmatpush1.msra.mxu0 0.0
    %110 = vmatprep.subr.mxu0 0.0
    %111 = vmatpush1.msra.mxu0 0.0
    %112 = vmatprep.subr.mxu0 0.0
    %113 = vmatpush1.msra.mxu0 0.0
    %114 = vmatprep.subr.mxu0 0.0
    %115 = vmatpush1.msra.mxu0 0.0
    %116 = vmatprep.subr.mxu0 0.0
    %117 = vmatpush1.msra.mxu0 0.0
    %118 = vmatprep.subr.mxu0 0.0
    %119 = vmatpush1.msra.mxu0 0.0
    %120 = vmatprep.subr.mxu0 0.0
    %121 = vmatpush1.msra.mxu0 0.0
    %122 = vmatprep.subr.mxu0 0.0
    %123 = vmatpush1.msra.mxu0 0.0
    %124 = vmatprep.subr.mxu0 0.0
    %125 = vmatpush1.msra.mxu0 0.0
    %126 = vmatprep.subr.mxu0 0.0
    %127 = vmatpush1.msra.mxu0 0.0
    %128 = vmatprep.subr.mxu0 0.0
    %129 = vmatpush1.msra.mxu0 0.0
    %130 = vmatprep.subr.mxu0 0.0
    %131 = vmatpush1.msra.mxu0 0.0
    %132 = vmatprep.subr.mxu0 0.0
    %133 = vmatpush1.msra.mxu0 0.0
    %134 = vmatprep.subr.mxu0 0.0
    %135 = vmatpush1.msra.mxu0 0.0
    %136 = vmatprep.mubr.f32.mxu0 0.0
    %137 = vmatmul.mubr.f32.gmra.mrb[0].mxu0 %v67
    %v138 = vpop.f32.mrb[0].mxu0
    %v139 = vadd.f32 0.0, %v138
    %v140 = vpop.f32.mrb[0].mxu0
    %141 = vmatprep.mubr.f32.mxu0 0.0
    %142 = vmatmul.mubr.f32.gmra.mrb[0].mxu0 %v70
    %v143 = vpop.f32.mrb[0].mxu0
    %v144 = vadd.f32 0.0, %v143
    %v145 = vpop.f32.mrb[0].mxu0
    %146 = vdwg.mxu0
    %v147 = vld [vmem:[%s1] sm:$0xff]
    %v148 = vld [vmem:[#allocation6] sm:$0xff]
    %v149 = vld [vmem:[#allocation6 + $0x8] sm:$0xff]
    %v150 = vld [vmem:[#allocation6 + $0x10] sm:$0xff]
    %v151 = vld [vmem:[#allocation6 + $0x18] sm:$0xff]
    %v152 = vld [vmem:[%s4] sm:$0x1]
    %v153 = vld [vmem:[%s5] sm:$0xff]
    %v154 = vld [vmem:[%s5 + $0x8] sm:$0xff]
    %v155 = vld [vmem:[%s5 + $0x10] sm:$0xff]
    %v156 = vld [vmem:[%s5 + $0x18] sm:$0xff]
    %s157 = sld [smem:[#allocation2]]
    %v158 = vadd.f32 %v139, %v147
    %160 = vrot.lane.b32.xlu0 %v158, 96
    %v161 = vpop.permute.xlu0 %160
    %vm162 = vcmask 64512
    %v163 = vsel %vm162, %v158, 0
    %v165 = vsel %vm162, %v161, 0
    %167 = vmatprep.subr.mxu0 0.0
    %168 = vmatpush1.xpose.msra.mxu0 %v165
    %169 = vmatprep.subr.mxu0 0.0
    %170 = vmatpush1.xpose.msra.mxu0 0.0
    %171 = vmatprep.subr.mxu0 0.0
    %172 = vmatpush1.xpose.msra.mxu0 0.0
    %173 = vmatprep.subr.mxu0 0.0
    %174 = vmatpush1.xpose.msra.mxu0 0.0
    %175 = vmatprep.subr.mxu0 0.0
    %176 = vmatpush1.xpose.msra.mxu0 0.0
    %177 = vmatprep.subr.mxu0 0.0
    %178 = vmatpush1.xpose.msra.mxu0 0.0
    %179 = vmatprep.subr.mxu0 0.0
    %180 = vmatpush1.xpose.msra.mxu0 0.0
    %181 = vmatprep.subr.mxu0 0.0
    %182 = vmatpush1.xpose.msra.mxu0 0.0
    %183 = vmatprep.subr.mxu0 0.0
    %184 = vmatpush1.xpose.msra.mxu0 0.0
    %185 = vmatprep.subr.mxu0 0.0
    %186 = vmatpush1.xpose.msra.mxu0 0.0
    %187 = vmatprep.subr.mxu0 0.0
    %188 = vmatpush1.xpose.msra.mxu0 0.0
    %189 = vmatprep.subr.mxu0 0.0
    %190 = vmatpush1.xpose.msra.mxu0 0.0
    %191 = vmatprep.subr.mxu0 0.0
    %192 = vmatpush1.xpose.msra.mxu0 0.0
    %193 = vmatprep.subr.mxu0 0.0
    %194 = vmatpush1.xpose.msra.mxu0 0.0
    %195 = vmatprep.subr.mxu0 0.0
    %196 = vmatpush1.xpose.msra.mxu0 0.0
    %197 = vmatprep.subr.mxu0 0.0
    %198 = vmatpush1.xpose.msra.mxu0 0.0
    %199 = vmatprep.subr.mxu0 0.0
    %200 = vmatpush1.xpose.msra.mxu0 0.0
    %201 = vmatprep.subr.mxu0 0.0
    %202 = vmatpush1.xpose.msra.mxu0 0.0
    %203 = vmatprep.subr.mxu0 0.0
    %204 = vmatpush1.xpose.msra.mxu0 0.0
    %205 = vmatprep.subr.mxu0 0.0
    %206 = vmatpush1.xpose.msra.mxu0 0.0
    %207 = vmatprep.subr.mxu0 0.0
    %208 = vmatpush1.xpose.msra.mxu0 0.0
    %209 = vmatprep.subr.mxu0 0.0
    %210 = vmatpush1.xpose.msra.mxu0 0.0
    %211 = vmatprep.subr.mxu0 0.0
    %212 = vmatpush1.xpose.msra.mxu0 0.0
    %213 = vmatprep.subr.mxu0 0.0
    %214 = vmatpush1.xpose.msra.mxu0 0.0
    %215 = vmatprep.subr.mxu0 0.0
    %216 = vmatpush1.xpose.msra.mxu0 0.0
    %217 = vmatprep.subr.mxu0 0.0
    %218 = vmatpush1.xpose.msra.mxu0 0.0
    %219 = vmatprep.subr.mxu0 0.0
    %220 = vmatpush1.xpose.msra.mxu0 0.0
    %221 = vmatprep.subr.mxu0 0.0
    %222 = vmatpush1.xpose.msra.mxu0 0.0
    %223 = vmatprep.subr.mxu0 0.0
    %224 = vmatpush1.xpose.msra.mxu0 0.0
    %225 = vmatprep.subr.mxu0 0.0
    %226 = vmatpush1.xpose.msra.mxu0 0.0
    %227 = vmatprep.subr.mxu0 0.0
    %228 = vmatpush1.xpose.msra.mxu0 0.0
    %229 = vmatprep.subr.mxu0 0.0
    %230 = vmatpush1.xpose.msra.mxu0 0.0
    %231 = vmatprep.mubr.f32.mxu0 0.0
    %232 = vmatmul.mubr.f32.gmra.mrb[0].mxu0 %v163
    %v233 = vpop.f32.mrb[0].mxu0
    %v234 = vadd.f32 0.0, %v233
    %v235 = vpop.f32.mrb[0].mxu0
    %236 = vdwg.mxu0
    %v237 = vmul.f32 %v234, 0.17677669
    %v238 = vsel %vm162, %v237, -inf
    %239 = vmax.xlane.f32.xlu0 %v238
    %v240 = vpop.xlane.xlu0 %239
    %v241 = vsub.f32 %v237, %v240
    %v242 = vmul.f32 %v241, 1.442695
    %v243 = vpow.pop %v242
    %v244 = vsel %vm162, %v243, 0.0
    %245 = vadd.xlane.f32.xlu0 %v244
    %v246 = vpop.xlane.xlu0 %245
    %v247 = vrcp.pop %v246
    %v248 = vmul.f32 %v243, %v247
    %249 = vrot.lane.b32.xlu0 %v158, 64
    %v250 = vpop.permute.xlu0 %249
    %v253 = vsel %vm162, %v248, 0
    %255 = vmatprep.subr.mxu0 0.0
    %256 = vmatpush1.msra.mxu0 %v250
    %257 = vmatprep.subr.mxu0 0.0
    %258 = vmatpush1.msra.mxu0 0.0
    %259 = vmatprep.subr.mxu0 0.0
    %260 = vmatpush1.msra.mxu0 0.0
    %261 = vmatprep.subr.mxu0 0.0
    %262 = vmatpush1.msra.mxu0 0.0
    %263 = vmatprep.subr.mxu0 0.0
    %264 = vmatpush1.msra.mxu0 0.0
    %265 = vmatprep.subr.mxu0 0.0
    %266 = vmatpush1.msra.mxu0 0.0
    %267 = vmatprep.subr.mxu0 0.0
    %268 = vmatpush1.msra.mxu0 0.0
    %269 = vmatprep.subr.mxu0 0.0
    %270 = vmatpush1.msra.mxu0 0.0
    %271 = vmatprep.subr.mxu0 0.0
    %272 = vmatpush1.msra.mxu0 0.0
    %273 = vmatprep.subr.mxu0 0.0
    %274 = vmatpush1.msra.mxu0 0.0
    %275 = vmatprep.subr.mxu0 0.0
    %276 = vmatpush1.msra.mxu0 0.0
    %277 = vmatprep.subr.mxu0 0.0
    %278 = vmatpush1.msra.mxu0 0.0
    %279 = vmatprep.subr.mxu0 0.0
    %280 = vmatpush1.msra.mxu0 0.0
    %281 = vmatprep.subr.mxu0 0.0
    %282 = vmatpush1.msra.mxu0 0.0
    %283 = vmatprep.subr.mxu0 0.0
    %284 = vmatpush1.msra.mxu0 0.0
    %285 = vmatprep.subr.mxu0 0.0
    %286 = vmatpush1.msra.mxu0 0.0
    %287 = vmatprep.subr.mxu0 0.0
    %288 = vmatpush1.msra.mxu0 0.0
    %289 = vmatprep.subr.mxu0 0.0
    %290 = vmatpush1.msra.mxu0 0.0
    %291 = vmatprep.subr.mxu0 0.0
    %292 = vmatpush1.msra.mxu0 0.0
    %293 = vmatprep.subr.mxu0 0.0
    %294 = vmatpush1.msra.mxu0 0.0
    %295 = vmatprep.subr.mxu0 0.0
    %296 = vmatpush1.msra.mxu0 0.0
    %297 = vmatprep.subr.mxu0 0.0
    %298 = vmatpush1.msra.mxu0 0.0
    %299 = vmatprep.subr.mxu0 0.0
    %300 = vmatpush1.msra.mxu0 0.0
    %301 = vmatprep.subr.mxu0 0.0
    %302 = vmatpush1.msra.mxu0 0.0
    %303 = vmatprep.subr.mxu0 0.0
    %304 = vmatpush1.msra.mxu0 0.0
    %305 = vmatprep.subr.mxu0 0.0
    %306 = vmatpush1.msra.mxu0 0.0
    %307 = vmatprep.subr.mxu0 0.0
    %308 = vmatpush1.msra.mxu0 0.0
    %309 = vmatprep.subr.mxu0 0.0
    %310 = vmatpush1.msra.mxu0 0.0
    %311 = vmatprep.subr.mxu0 0.0
    %312 = vmatpush1.msra.mxu0 0.0
    %313 = vmatprep.subr.mxu0 0.0
    %314 = vmatpush1.msra.mxu0 0.0
    %315 = vmatprep.subr.mxu0 0.0
    %316 = vmatpush1.msra.mxu0 0.0
    %317 = vmatprep.subr.mxu0 0.0
    %318 = vmatpush1.msra.mxu0 0.0
    %319 = vmatprep.mubr.f32.mxu0 0.0
    %320 = vmatmul.mubr.f32.gmra.mrb[0].mxu0 %v253
    %v321 = vpop.f32.mrb[0].mxu0
    %v322 = vadd.f32 0.0, %v321
    %v323 = vpop.f32.mrb[0].mxu0
    %324 = vdwg.mxu0
    %325 = vrot.lane.b32.xlu0 %v158, 120
    %v326 = vpop.permute.xlu0 %325
    %327 = vrot.lane.b32.xlu0 %v158, 88
    %v328 = vpop.permute.xlu0 %327
    %v329 = vsel %vm162, %v326, 0
    %v331 = vsel %vm162, %v328, 0
    %333 = vmatprep.subr.mxu0 0.0
    %334 = vmatpush1.xpose.msra.mxu0 %v331
    %335 = vmatprep.subr.mxu0 0.0
    %336 = vmatpush1.xpose.msra.mxu0 0.0
    %337 = vmatprep.subr.mxu0 0.0
    %338 = vmatpush1.xpose.msra.mxu0 0.0
    %339 = vmatprep.subr.mxu0 0.0
    %340 = vmatpush1.xpose.msra.mxu0 0.0
    %341 = vmatprep.subr.mxu0 0.0
    %342 = vmatpush1.xpose.msra.mxu0 0.0
    %343 = vmatprep.subr.mxu0 0.0
    %344 = vmatpush1.xpose.msra.mxu0 0.0
    %345 = vmatprep.subr.mxu0 0.0
    %346 = vmatpush1.xpose.msra.mxu0 0.0
    %347 = vmatprep.subr.mxu0 0.0
    %348 = vmatpush1.xpose.msra.mxu0 0.0
    %349 = vmatprep.subr.mxu0 0.0
    %350 = vmatpush1.xpose.msra.mxu0 0.0
    %351 = vmatprep.subr.mxu0 0.0
    %352 = vmatpush1.xpose.msra.mxu0 0.0
    %353 = vmatprep.subr.mxu0 0.0
    %354 = vmatpush1.xpose.msra.mxu0 0.0
    %355 = vmatprep.subr.mxu0 0.0
    %356 = vmatpush1.xpose.msra.mxu0 0.0
    %357 = vmatprep.subr.mxu0 0.0
    %358 = vmatpush1.xpose.msra.mxu0 0.0
    %359 = vmatprep.subr.mxu0 0.0
    %360 = vmatpush1.xpose.msra.mxu0 0.0
    %361 = vmatprep.subr.mxu0 0.0
    %362 = vmatpush1.xpose.msra.mxu0 0.0
    %363 = vmatprep.subr.mxu0 0.0
    %364 = vmatpush1.xpose.msra.mxu0 0.0
    %365 = vmatprep.subr.mxu0 0.0
    %366 = vmatpush1.xpose.msra.mxu0 0.0
    %367 = vmatprep.subr.mxu0 0.0
    %368 = vmatpush1.xpose.msra.mxu0 0.0
    %369 = vmatprep.subr.mxu0 0.0
    %370 = vmatpush1.xpose.msra.mxu0 0.0
    %371 = vmatprep.subr.mxu0 0.0
    %372 = vmatpush1.xpose.msra.mxu0 0.0
    %373 = vmatprep.subr.mxu0 0.0
    %374 = vmatpush1.xpose.msra.mxu0 0.0
    %375 = vmatprep.subr.mxu0 0.0
    %376 = vmatpush1.xpose.msra.mxu0 0.0
    %377 = vmatprep.subr.mxu0 0.0
    %378 = vmatpush1.xpose.msra.mxu0 0.0
    %379 = vmatprep.subr.mxu0 0.0
    %380 = vmatpush1.xpose.msra.mxu0 0.0
    %381 = vmatprep.subr.mxu0 0.0
    %382 = vmatpush1.xpose.msra.mxu0 0.0
    %383 = vmatprep.subr.mxu0 0.0
    %384 = vmatpush1.xpose.msra.mxu0 0.0
    %385 = vmatprep.subr.mxu0 0.0
    %386 = vmatpush1.xpose.msra.mxu0 0.0
    %387 = vmatprep.subr.mxu0 0.0
    %388 = vmatpush1.xpose.msra.mxu0 0.0
    %389 = vmatprep.subr.mxu0 0.0
    %390 = vmatpush1.xpose.msra.mxu0 0.0
    %391 = vmatprep.subr.mxu0 0.0
    %392 = vmatpush1.xpose.msra.mxu0 0.0
    %393 = vmatprep.subr.mxu0 0.0
    %394 = vmatpush1.xpose.msra.mxu0 0.0
    %395 = vmatprep.subr.mxu0 0.0
    %396 = vmatpush1.xpose.msra.mxu0 0.0
    %397 = vmatprep.mubr.f32.mxu0 0.0
    %398 = vmatmul.mubr.f32.gmra.mrb[0].mxu0 %v329
    %v399 = vpop.f32.mrb[0].mxu0
    %v400 = vadd.f32 0.0, %v399
    %v401 = vpop.f32.mrb[0].mxu0
    %402 = vdwg.mxu0
    %v403 = vmul.f32 %v400, 0.17677669
    %v404 = vsel %vm162, %v403, -inf
    %405 = vmax.xlane.f32.xlu0 %v404
    %v406 = vpop.xlane.xlu0 %405
    %v407 = vsub.f32 %v403, %v406
    %v408 = vmul.f32 %v407, 1.442695
    %v409 = vpow.pop %v408
    %v410 = vsel %vm162, %v409, 0.0
    %411 = vadd.xlane.f32.xlu0 %v410
    %v412 = vpop.xlane.xlu0 %411
    %v413 = vrcp.pop %v412
    %v414 = vmul.f32 %v409, %v413
    %415 = vrot.lane.b32.xlu0 %v158, 56
    %v416 = vpop.permute.xlu0 %415
    %v419 = vsel %vm162, %v414, 0
    %421 = vmatprep.subr.mxu0 0.0
    %422 = vmatpush1.msra.mxu0 %v416
    %423 = vmatprep.subr.mxu0 0.0
    %424 = vmatpush1.msra.mxu0 0.0
    %425 = vmatprep.subr.mxu0 0.0
    %426 = vmatpush1.msra.mxu0 0.0
    %427 = vmatprep.subr.mxu0 0.0
    %428 = vmatpush1.msra.mxu0 0.0
    %429 = vmatprep.subr.mxu0 0.0
    %430 = vmatpush1.msra.mxu0 0.0
    %431 = vmatprep.subr.mxu0 0.0
    %432 = vmatpush1.msra.mxu0 0.0
    %433 = vmatprep.subr.mxu0 0.0
    %434 = vmatpush1.msra.mxu0 0.0
    %435 = vmatprep.subr.mxu0 0.0
    %436 = vmatpush1.msra.mxu0 0.0
    %437 = vmatprep.subr.mxu0 0.0
    %438 = vmatpush1.msra.mxu0 0.0
    %439 = vmatprep.subr.mxu0 0.0
    %440 = vmatpush1.msra.mxu0 0.0
    %441 = vmatprep.subr.mxu0 0.0
    %442 = vmatpush1.msra.mxu0 0.0
    %443 = vmatprep.subr.mxu0 0.0
    %444 = vmatpush1.msra.mxu0 0.0
    %445 = vmatprep.subr.mxu0 0.0
    %446 = vmatpush1.msra.mxu0 0.0
    %447 = vmatprep.subr.mxu0 0.0
    %448 = vmatpush1.msra.mxu0 0.0
    %449 = vmatprep.subr.mxu0 0.0
    %450 = vmatpush1.msra.mxu0 0.0
    %451 = vmatprep.subr.mxu0 0.0
    %452 = vmatpush1.msra.mxu0 0.0
    %453 = vmatprep.subr.mxu0 0.0
    %454 = vmatpush1.msra.mxu0 0.0
    %455 = vmatprep.subr.mxu0 0.0
    %456 = vmatpush1.msra.mxu0 0.0
    %457 = vmatprep.subr.mxu0 0.0
    %458 = vmatpush1.msra.mxu0 0.0
    %459 = vmatprep.subr.mxu0 0.0
    %460 = vmatpush1.msra.mxu0 0.0
    %461 = vmatprep.subr.mxu0 0.0
    %462 = vmatpush1.msra.mxu0 0.0
    %463 = vmatprep.subr.mxu0 0.0
    %464 = vmatpush1.msra.mxu0 0.0
    %465 = vmatprep.subr.mxu0 0.0
    %466 = vmatpush1.msra.mxu0 0.0
    %467 = vmatprep.subr.mxu0 0.0
    %468 = vmatpush1.msra.mxu0 0.0
    %469 = vmatprep.subr.mxu0 0.0
    %470 = vmatpush1.msra.mxu0 0.0
    %471 = vmatprep.subr.mxu0 0.0
    %472 = vmatpush1.msra.mxu0 0.0
    %473 = vmatprep.subr.mxu0 0.0
    %474 = vmatpush1.msra.mxu0 0.0
    %475 = vmatprep.subr.mxu0 0.0
    %476 = vmatpush1.msra.mxu0 0.0
    %477 = vmatprep.subr.mxu0 0.0
    %478 = vmatpush1.msra.mxu0 0.0
    %479 = vmatprep.subr.mxu0 0.0
    %480 = vmatpush1.msra.mxu0 0.0
    %481 = vmatprep.subr.mxu0 0.0
    %482 = vmatpush1.msra.mxu0 0.0
    %483 = vmatprep.subr.mxu0 0.0
    %484 = vmatpush1.msra.mxu0 0.0
    %485 = vmatprep.mubr.f32.mxu0 0.0
    %486 = vmatmul.mubr.f32.gmra.mrb[0].mxu0 %v419
    %v487 = vpop.f32.mrb[0].mxu0
    %v488 = vadd.f32 0.0, %v487
    %v489 = vpop.f32.mrb[0].mxu0
    %490 = vdwg.mxu0
    %v492 = vsel %vm162, %v488, 0
    %494 = vmatprep.subr.mxu0 0.0
    %495 = vmatpush1.msra.mxu0 %v149
    %496 = vmatprep.subr.mxu0 0.0
    %497 = vmatpush1.msra.mxu0 0.0
    %498 = vmatprep.subr.mxu0 0.0
    %499 = vmatpush1.msra.mxu0 0.0
    %500 = vmatprep.subr.mxu0 0.0
    %501 = vmatpush1.msra.mxu0 0.0
    %502 = vmatprep.subr.mxu0 0.0
    %503 = vmatpush1.msra.mxu0 0.0
    %504 = vmatprep.subr.mxu0 0.0
    %505 = vmatpush1.msra.mxu0 0.0
    %506 = vmatprep.subr.mxu0 0.0
    %507 = vmatpush1.msra.mxu0 0.0
    %508 = vmatprep.subr.mxu0 0.0
    %509 = vmatpush1.msra.mxu0 0.0
    %510 = vmatprep.subr.mxu0 0.0
    %511 = vmatpush1.msra.mxu0 0.0
    %512 = vmatprep.subr.mxu0 0.0
    %513 = vmatpush1.msra.mxu0 0.0
    %514 = vmatprep.subr.mxu0 0.0
    %515 = vmatpush1.msra.mxu0 0.0
    %516 = vmatprep.subr.mxu0 0.0
    %517 = vmatpush1.msra.mxu0 0.0
    %518 = vmatprep.subr.mxu0 0.0
    %519 = vmatpush1.msra.mxu0 0.0
    %520 = vmatprep.subr.mxu0 0.0
    %521 = vmatpush1.msra.mxu0 0.0
    %522 = vmatprep.subr.mxu0 0.0
    %523 = vmatpush1.msra.mxu0 0.0
    %524 = vmatprep.subr.mxu0 0.0
    %525 = vmatpush1.msra.mxu0 0.0
    %526 = vmatprep.subr.mxu0 0.0
    %527 = vmatpush1.msra.mxu0 0.0
    %528 = vmatprep.subr.mxu0 0.0
    %529 = vmatpush1.msra.mxu0 0.0
    %530 = vmatprep.subr.mxu0 0.0
    %531 = vmatpush1.msra.mxu0 0.0
    %532 = vmatprep.subr.mxu0 0.0
    %533 = vmatpush1.msra.mxu0 0.0
    %534 = vmatprep.subr.mxu0 0.0
    %535 = vmatpush1.msra.mxu0 0.0
    %536 = vmatprep.subr.mxu0 0.0
    %537 = vmatpush1.msra.mxu0 0.0
    %538 = vmatprep.subr.mxu0 0.0
    %539 = vmatpush1.msra.mxu0 0.0
    %540 = vmatprep.subr.mxu0 0.0
    %541 = vmatpush1.msra.mxu0 0.0
    %542 = vmatprep.subr.mxu0 0.0
    %543 = vmatpush1.msra.mxu0 0.0
    %544 = vmatprep.subr.mxu0 0.0
    %545 = vmatpush1.msra.mxu0 0.0
    %546 = vmatprep.subr.mxu0 0.0
    %547 = vmatpush1.msra.mxu0 0.0
    %548 = vmatprep.subr.mxu0 0.0
    %549 = vmatpush1.msra.mxu0 0.0
    %550 = vmatprep.subr.mxu0 0.0
    %551 = vmatpush1.msra.mxu0 0.0
    %552 = vmatprep.subr.mxu0 0.0
    %553 = vmatpush1.msra.mxu0 0.0
    %554 = vmatprep.subr.mxu0 0.0
    %555 = vmatpush1.msra.mxu0 0.0
    %556 = vmatprep.subr.mxu0 0.0
    %557 = vmatpush1.msra.mxu0 0.0
    %558 = vmatprep.mubr.f32.mxu0 0.0
    %559 = vmatmul.mubr.f32.gmra.mrb[0].mxu0 %v492
    %v560 = vpop.f32.mrb[0].mxu0
    %v561 = vadd.f32 0.0, %v560
    %v562 = vpop.f32.mrb[0].mxu0
    %563 = vdwg.mxu0
    %v565 = vsel %vm162, %v322, 0
    %567 = vmatprep.subr.mxu0 0.0
    %568 = vmatpush1.msra.mxu0 %v148
    %569 = vmatprep.subr.mxu0 0.0
    %570 = vmatpush1.msra.mxu0 0.0
    %571 = vmatprep.subr.mxu0 0.0
    %572 = vmatpush1.msra.mxu0 0.0
    %573 = vmatprep.subr.mxu0 0.0
    %574 = vmatpush1.msra.mxu0 0.0
    %575 = vmatprep.subr.mxu0 0.0
    %576 = vmatpush1.msra.mxu0 0.0
    %577 = vmatprep.subr.mxu0 0.0
    %578 = vmatpush1.msra.mxu0 0.0
    %579 = vmatprep.subr.mxu0 0.0
    %580 = vmatpush1.msra.mxu0 0.0
    %581 = vmatprep.subr.mxu0 0.0
    %582 = vmatpush1.msra.mxu0 0.0
    %583 = vmatprep.subr.mxu0 0.0
    %584 = vmatpush1.msra.mxu0 0.0
    %585 = vmatprep.subr.mxu0 0.0
    %586 = vmatpush1.msra.mxu0 0.0
    %587 = vmatprep.subr.mxu0 0.0
    %588 = vmatpush1.msra.mxu0 0.0
    %589 = vmatprep.subr.mxu0 0.0
    %590 = vmatpush1.msra.mxu0 0.0
    %591 = vmatprep.subr.mxu0 0.0
    %592 = vmatpush1.msra.mxu0 0.0
    %593 = vmatprep.subr.mxu0 0.0
    %594 = vmatpush1.msra.mxu0 0.0
    %595 = vmatprep.subr.mxu0 0.0
    %596 = vmatpush1.msra.mxu0 0.0
    %597 = vmatprep.subr.mxu0 0.0
    %598 = vmatpush1.msra.mxu0 0.0
    %599 = vmatprep.subr.mxu0 0.0
    %600 = vmatpush1.msra.mxu0 0.0
    %601 = vmatprep.subr.mxu0 0.0
    %602 = vmatpush1.msra.mxu0 0.0
    %603 = vmatprep.subr.mxu0 0.0
    %604 = vmatpush1.msra.mxu0 0.0
    %605 = vmatprep.subr.mxu0 0.0
    %606 = vmatpush1.msra.mxu0 0.0
    %607 = vmatprep.subr.mxu0 0.0
    %608 = vmatpush1.msra.mxu0 0.0
    %609 = vmatprep.subr.mxu0 0.0
    %610 = vmatpush1.msra.mxu0 0.0
    %611 = vmatprep.subr.mxu0 0.0
    %612 = vmatpush1.msra.mxu0 0.0
    %613 = vmatprep.subr.mxu0 0.0
    %614 = vmatpush1.msra.mxu0 0.0
    %615 = vmatprep.subr.mxu0 0.0
    %616 = vmatpush1.msra.mxu0 0.0
    %617 = vmatprep.subr.mxu0 0.0
    %618 = vmatpush1.msra.mxu0 0.0
    %619 = vmatprep.subr.mxu0 0.0
    %620 = vmatpush1.msra.mxu0 0.0
    %621 = vmatprep.subr.mxu0 0.0
    %622 = vmatpush1.msra.mxu0 0.0
    %623 = vmatprep.subr.mxu0 0.0
    %624 = vmatpush1.msra.mxu0 0.0
    %625 = vmatprep.subr.mxu0 0.0
    %626 = vmatpush1.msra.mxu0 0.0
    %627 = vmatprep.subr.mxu0 0.0
    %628 = vmatpush1.msra.mxu0 0.0
    %629 = vmatprep.subr.mxu0 0.0
    %630 = vmatpush1.msra.mxu0 0.0
    %631 = vmatprep.mubr.f32.mxu0 0.0
    %632 = vmatmul.mubr.f32.gmra.mrb[0].mxu0 %v565
    %v633 = vpop.f32.mrb[0].mxu0
    %v634 = vadd.f32 %v561, %v633
    %v635 = vpop.f32.mrb[0].mxu0
    %636 = vdwg.mxu0
    %637 = vrot.lane.b32.xlu0 %v158, 112
    %v638 = vpop.permute.xlu0 %637
    %639 = vrot.lane.b32.xlu0 %v158, 80
    %v640 = vpop.permute.xlu0 %639
    %v641 = vsel %vm162, %v638, 0
    %v643 = vsel %vm162, %v640, 0
    %645 = vmatprep.subr.mxu0 0.0
    %646 = vmatpush1.xpose.msra.mxu0 %v643
    %647 = vmatprep.subr.mxu0 0.0
    %648 = vmatpush1.xpose.msra.mxu0 0.0
    %649 = vmatprep.subr.mxu0 0.0
    %650 = vmatpush1.xpose.msra.mxu0 0.0
    %651 = vmatprep.subr.mxu0 0.0
    %652 = vmatpush1.xpose.msra.mxu0 0.0
    %653 = vmatprep.subr.mxu0 0.0
    %654 = vmatpush1.xpose.msra.mxu0 0.0
    %655 = vmatprep.subr.mxu0 0.0
    %656 = vmatpush1.xpose.msra.mxu0 0.0
    %657 = vmatprep.subr.mxu0 0.0
    %658 = vmatpush1.xpose.msra.mxu0 0.0
    %659 = vmatprep.subr.mxu0 0.0
    %660 = vmatpush1.xpose.msra.mxu0 0.0
    %661 = vmatprep.subr.mxu0 0.0
    %662 = vmatpush1.xpose.msra.mxu0 0.0
    %663 = vmatprep.subr.mxu0 0.0
    %664 = vmatpush1.xpose.msra.mxu0 0.0
    %665 = vmatprep.subr.mxu0 0.0
    %666 = vmatpush1.xpose.msra.mxu0 0.0
    %667 = vmatprep.subr.mxu0 0.0
    %668 = vmatpush1.xpose.msra.mxu0 0.0
    %669 = vmatprep.subr.mxu0 0.0
    %670 = vmatpush1.xpose.msra.mxu0 0.0
    %671 = vmatprep.subr.mxu0 0.0
    %672 = vmatpush1.xpose.msra.mxu0 0.0
    %673 = vmatprep.subr.mxu0 0.0
    %674 = vmatpush1.xpose.msra.mxu0 0.0
    %675 = vmatprep.subr.mxu0 0.0
    %676 = vmatpush1.xpose.msra.mxu0 0.0
    %677 = vmatprep.subr.mxu0 0.0
    %678 = vmatpush1.xpose.msra.mxu0 0.0
    %679 = vmatprep.subr.mxu0 0.0
    %680 = vmatpush1.xpose.msra.mxu0 0.0
    %681 = vmatprep.subr.mxu0 0.0
    %682 = vmatpush1.xpose.msra.mxu0 0.0
    %683 = vmatprep.subr.mxu0 0.0
    %684 = vmatpush1.xpose.msra.mxu0 0.0
    %685 = vmatprep.subr.mxu0 0.0
    %686 = vmatpush1.xpose.msra.mxu0 0.0
    %687 = vmatprep.subr.mxu0 0.0
    %688 = vmatpush1.xpose.msra.mxu0 0.0
    %689 = vmatprep.subr.mxu0 0.0
    %690 = vmatpush1.xpose.msra.mxu0 0.0
    %691 = vmatprep.subr.mxu0 0.0
    %692 = vmatpush1.xpose.msra.mxu0 0.0
    %693 = vmatprep.subr.mxu0 0.0
    %694 = vmatpush1.xpose.msra.mxu0 0.0
    %695 = vmatprep.subr.mxu0 0.0
    %696 = vmatpush1.xpose.msra.mxu0 0.0
    %697 = vmatprep.subr.mxu0 0.0
    %698 = vmatpush1.xpose.msra.mxu0 0.0
    %699 = vmatprep.subr.mxu0 0.0
    %700 = vmatpush1.xpose.msra.mxu0 0.0
    %701 = vmatprep.subr.mxu0 0.0
    %702 = vmatpush1.xpose.msra.mxu0 0.0
    %703 = vmatprep.subr.mxu0 0.0
    %704 = vmatpush1.xpose.msra.mxu0 0.0
    %705 = vmatprep.subr.mxu0 0.0
    %706 = vmatpush1.xpose.msra.mxu0 0.0
    %707 = vmatprep.subr.mxu0 0.0
    %708 = vmatpush1.xpose.msra.mxu0 0.0
    %709 = vmatprep.mubr.f32.mxu0 0.0
    %710 = vmatmul.mubr.f32.gmra.mrb[0].mxu0 %v641
    %v711 = vpop.f32.mrb[0].mxu0
    %v712 = vadd.f32 0.0, %v711
    %v713 = vpop.f32.mrb[0].mxu0
    %714 = vdwg.mxu0
    %v715 = vmul.f32 %v712, 0.17677669
    %v716 = vsel %vm162, %v715, -inf
    %717 = vmax.xlane.f32.xlu0 %v716
    %v718 = vpop.xlane.xlu0 %717
    %v719 = vsub.f32 %v715, %v718
    %v720 = vmul.f32 %v719, 1.442695
    %v721 = vpow.pop %v720
    %v722 = vsel %vm162, %v721, 0.0
    %723 = vadd.xlane.f32.xlu0 %v722
    %v724 = vpop.xlane.xlu0 %723
    %v725 = vrcp.pop %v724
    %v726 = vmul.f32 %v721, %v725
    %727 = vrot.lane.b32.xlu0 %v158, 48
    %v728 = vpop.permute.xlu0 %727
    %v731 = vsel %vm162, %v726, 0
    %733 = vmatprep.subr.mxu0 0.0
    %734 = vmatpush1.msra.mxu0 %v728
    %735 = vmatprep.subr.mxu0 0.0
    %736 = vmatpush1.msra.mxu0 0.0
    %737 = vmatprep.subr.mxu0 0.0
    %738 = vmatpush1.msra.mxu0 0.0
    %739 = vmatprep.subr.mxu0 0.0
    %740 = vmatpush1.msra.mxu0 0.0
    %741 = vmatprep.subr.mxu0 0.0
    %742 = vmatpush1.msra.mxu0 0.0
    %743 = vmatprep.subr.mxu0 0.0
    %744 = vmatpush1.msra.mxu0 0.0
    %745 = vmatprep.subr.mxu0 0.0
    %746 = vmatpush1.msra.mxu0 0.0
    %747 = vmatprep.subr.mxu0 0.0
    %748 = vmatpush1.msra.mxu0 0.0
    %749 = vmatprep.subr.mxu0 0.0
    %750 = vmatpush1.msra.mxu0 0.0
    %751 = vmatprep.subr.mxu0 0.0
    %752 = vmatpush1.msra.mxu0 0.0
    %753 = vmatprep.subr.mxu0 0.0
    %754 = vmatpush1.msra.mxu0 0.0
    %755 = vmatprep.subr.mxu0 0.0
    %756 = vmatpush1.msra.mxu0 0.0
    %757 = vmatprep.subr.mxu0 0.0
    %758 = vmatpush1.msra.mxu0 0.0
    %759 = vmatprep.subr.mxu0 0.0
    %760 = vmatpush1.msra.mxu0 0.0
    %761 = vmatprep.subr.mxu0 0.0
    %762 = vmatpush1.msra.mxu0 0.0
    %763 = vmatprep.subr.mxu0 0.0
    %764 = vmatpush1.msra.mxu0 0.0
    %765 = vmatprep.subr.mxu0 0.0
    %766 = vmatpush1.msra.mxu0 0.0
    %767 = vmatprep.subr.mxu0 0.0
    %768 = vmatpush1.msra.mxu0 0.0
    %769 = vmatprep.subr.mxu0 0.0
    %770 = vmatpush1.msra.mxu0 0.0
    %771 = vmatprep.subr.mxu0 0.0
    %772 = vmatpush1.msra.mxu0 0.0
    %773 = vmatprep.subr.mxu0 0.0
    %774 = vmatpush1.msra.mxu0 0.0
    %775 = vmatprep.subr.mxu0 0.0
    %776 = vmatpush1.msra.mxu0 0.0
    %777 = vmatprep.subr.mxu0 0.0
    %778 = vmatpush1.msra.mxu0 0.0
    %779 = vmatprep.subr.mxu0 0.0
    %780 = vmatpush1.msra.mxu0 0.0
    %781 = vmatprep.subr.mxu0 0.0
    %782 = vmatpush1.msra.mxu0 0.0
    %783 = vmatprep.subr.mxu0 0.0
    %784 = vmatpush1.msra.mxu0 0.0
    %785 = vmatprep.subr.mxu0 0.0
    %786 = vmatpush1.msra.mxu0 0.0
    %787 = vmatprep.subr.mxu0 0.0
    %788 = vmatpush1.msra.mxu0 0.0
    %789 = vmatprep.subr.mxu0 0.0
    %790 = vmatpush1.msra.mxu0 0.0
    %791 = vmatprep.subr.mxu0 0.0
    %792 = vmatpush1.msra.mxu0 0.0
    %793 = vmatprep.subr.mxu0 0.0
    %794 = vmatpush1.msra.mxu0 0.0
    %795 = vmatprep.subr.mxu0 0.0
    %796 = vmatpush1.msra.mxu0 0.0
    %797 = vmatprep.mubr.f32.mxu0 0.0
    %798 = vmatmul.mubr.f32.gmra.mrb[0].mxu0 %v731
    %v799 = vpop.f32.mrb[0].mxu0
    %v800 = vadd.f32 0.0, %v799
    %v801 = vpop.f32.mrb[0].mxu0
    %802 = vdwg.mxu0
    %v804 = vsel %vm162, %v800, 0
    %806 = vmatprep.subr.mxu0 0.0
    %807 = vmatpush1.msra.mxu0 %v150
    %808 = vmatprep.subr.mxu0 0.0
    %809 = vmatpush1.msra.mxu0 0.0
    %810 = vmatprep.subr.mxu0 0.0
    %811 = vmatpush1.msra.mxu0 0.0
    %812 = vmatprep.subr.mxu0 0.0
    %813 = vmatpush1.msra.mxu0 0.0
    %814 = vmatprep.subr.mxu0 0.0
    %815 = vmatpush1.msra.mxu0 0.0
    %816 = vmatprep.subr.mxu0 0.0
    %817 = vmatpush1.msra.mxu0 0.0
    %818 = vmatprep.subr.mxu0 0.0
    %819 = vmatpush1.msra.mxu0 0.0
    %820 = vmatprep.subr.mxu0 0.0
    %821 = vmatpush1.msra.mxu0 0.0
    %822 = vmatprep.subr.mxu0 0.0
    %823 = vmatpush1.msra.mxu0 0.0
    %824 = vmatprep.subr.mxu0 0.0
    %825 = vmatpush1.msra.mxu0 0.0
    %826 = vmatprep.subr.mxu0 0.0
    %827 = vmatpush1.msra.mxu0 0.0
    %828 = vmatprep.subr.mxu0 0.0
    %829 = vmatpush1.msra.mxu0 0.0
    %830 = vmatprep.subr.mxu0 0.0
    %831 = vmatpush1.msra.mxu0 0.0
    %832 = vmatprep.subr.mxu0 0.0
    %833 = vmatpush1.msra.mxu0 0.0
    %834 = vmatprep.subr.mxu0 0.0
    %835 = vmatpush1.msra.mxu0 0.0
    %836 = vmatprep.subr.mxu0 0.0
    %837 = vmatpush1.msra.mxu0 0.0
    %838 = vmatprep.subr.mxu0 0.0
    %839 = vmatpush1.msra.mxu0 0.0
    %840 = vmatprep.subr.mxu0 0.0
    %841 = vmatpush1.msra.mxu0 0.0
    %842 = vmatprep.subr.mxu0 0.0
    %843 = vmatpush1.msra.mxu0 0.0
    %844 = vmatprep.subr.mxu0 0.0
    %845 = vmatpush1.msra.mxu0 0.0
    %846 = vmatprep.subr.mxu0 0.0
    %847 = vmatpush1.msra.mxu0 0.0
    %848 = vmatprep.subr.mxu0 0.0
    %849 = vmatpush1.msra.mxu0 0.0
    %850 = vmatprep.subr.mxu0 0.0
    %851 = vmatpush1.msra.mxu0 0.0
    %852 = vmatprep.subr.mxu0 0.0
    %853 = vmatpush1.msra.mxu0 0.0
    %854 = vmatprep.subr.mxu0 0.0
    %855 = vmatpush1.msra.mxu0 0.0
    %856 = vmatprep.subr.mxu0 0.0
    %857 = vmatpush1.msra.mxu0 0.0
    %858 = vmatprep.subr.mxu0 0.0
    %859 = vmatpush1.msra.mxu0 0.0
    %860 = vmatprep.subr.mxu0 0.0
    %861 = vmatpush1.msra.mxu0 0.0
    %862 = vmatprep.subr.mxu0 0.0
    %863 = vmatpush1.msra.mxu0 0.0
    %864 = vmatprep.subr.mxu0 0.0
    %865 = vmatpush1.msra.mxu0 0.0
    %866 = vmatprep.subr.mxu0 0.0
    %867 = vmatpush1.msra.mxu0 0.0
    %868 = vmatprep.subr.mxu0 0.0
    %869 = vmatpush1.msra.mxu0 0.0
    %870 = vmatprep.mubr.f32.mxu0 0.0
    %871 = vmatmul.mubr.f32.gmra.mrb[0].mxu0 %v804
    %v872 = vpop.f32.mrb[0].mxu0
    %v873 = vadd.f32 0.0, %v872
    %v874 = vpop.f32.mrb[0].mxu0
    %875 = vdwg.mxu0
    %v876 = vadd.f32 %v634, %v873
    %877 = vrot.lane.b32.xlu0 %v158, 104
    %v878 = vpop.permute.xlu0 %877
    %879 = vrot.lane.b32.xlu0 %v158, 72
    %v880 = vpop.permute.xlu0 %879
    %v881 = vsel %vm162, %v878, 0
    %v883 = vsel %vm162, %v880, 0
    %885 = vmatprep.subr.mxu0 0.0
    %886 = vmatpush1.xpose.msra.mxu0 %v883
    %887 = vmatprep.subr.mxu0 0.0
    %888 = vmatpush1.xpose.msra.mxu0 0.0
    %889 = vmatprep.subr.mxu0 0.0
    %890 = vmatpush1.xpose.msra.mxu0 0.0
    %891 = vmatprep.subr.mxu0 0.0
    %892 = vmatpush1.xpose.msra.mxu0 0.0
    %893 = vmatprep.subr.mxu0 0.0
    %894 = vmatpush1.xpose.msra.mxu0 0.0
    %895 = vmatprep.subr.mxu0 0.0
    %896 = vmatpush1.xpose.msra.mxu0 0.0
    %897 = vmatprep.subr.mxu0 0.0
    %898 = vmatpush1.xpose.msra.mxu0 0.0
    %899 = vmatprep.subr.mxu0 0.0
    %900 = vmatpush1.xpose.msra.mxu0 0.0
    %901 = vmatprep.subr.mxu0 0.0
    %902 = vmatpush1.xpose.msra.mxu0 0.0
    %903 = vmatprep.subr.mxu0 0.0
    %904 = vmatpush1.xpose.msra.mxu0 0.0
    %905 = vmatprep.subr.mxu0 0.0
    %906 = vmatpush1.xpose.msra.mxu0 0.0
    %907 = vmatprep.subr.mxu0 0.0
    %908 = vmatpush1.xpose.msra.mxu0 0.0
    %909 = vmatprep.subr.mxu0 0.0
    %910 = vmatpush1.xpose.msra.mxu0 0.0
    %911 = vmatprep.subr.mxu0 0.0
    %912 = vmatpush1.xpose.msra.mxu0 0.0
    %913 = vmatprep.subr.mxu0 0.0
    %914 = vmatpush1.xpose.msra.mxu0 0.0
    %915 = vmatprep.subr.mxu0 0.0
    %916 = vmatpush1.xpose.msra.mxu0 0.0
    %917 = vmatprep.subr.mxu0 0.0
    %918 = vmatpush1.xpose.msra.mxu0 0.0
    %919 = vmatprep.subr.mxu0 0.0
    %920 = vmatpush1.xpose.msra.mxu0 0.0
    %921 = vmatprep.subr.mxu0 0.0
    %922 = vmatpush1.xpose.msra.mxu0 0.0
    %923 = vmatprep.subr.mxu0 0.0
    %924 = vmatpush1.xpose.msra.mxu0 0.0
    %925 = vmatprep.subr.mxu0 0.0
    %926 = vmatpush1.xpose.msra.mxu0 0.0
    %927 = vmatprep.subr.mxu0 0.0
    %928 = vmatpush1.xpose.msra.mxu0 0.0
    %929 = vmatprep.subr.mxu0 0.0
    %930 = vmatpush1.xpose.msra.mxu0 0.0
    %931 = vmatprep.subr.mxu0 0.0
    %932 = vmatpush1.xpose.msra.mxu0 0.0
    %933 = vmatprep.subr.mxu0 0.0
    %934 = vmatpush1.xpose.msra.mxu0 0.0
    %935 = vmatprep.subr.mxu0 0.0
    %936 = vmatpush1.xpose.msra.mxu0 0.0
    %937 = vmatprep.subr.mxu0 0.0
    %938 = vmatpush1.xpose.msra.mxu0 0.0
    %939 = vmatprep.subr.mxu0 0.0
    %940 = vmatpush1.xpose.msra.mxu0 0.0
    %941 = vmatprep.subr.mxu0 0.0
    %942 = vmatpush1.xpose.msra.mxu0 0.0
    %943 = vmatprep.subr.mxu0 0.0
    %944 = vmatpush1.xpose.msra.mxu0 0.0
    %945 = vmatprep.subr.mxu0 0.0
    %946 = vmatpush1.xpose.msra.mxu0 0.0
    %947 = vmatprep.subr.mxu0 0.0
    %948 = vmatpush1.xpose.msra.mxu0 0.0
    %949 = vmatprep.mubr.f32.mxu0 0.0
    %950 = vmatmul.mubr.f32.gmra.mrb[0].mxu0 %v881
    %v951 = vpop.f32.mrb[0].mxu0
    %v952 = vadd.f32 0.0, %v951
    %v953 = vpop.f32.mrb[0].mxu0
    %954 = vdwg.mxu0
    %v955 = vmul.f32 %v952, 0.17677669
    %v956 = vsel %vm162, %v955, -inf
    %957 = vmax.xlane.f32.xlu0 %v956
    %v958 = vpop.xlane.xlu0 %957
    %v959 = vsub.f32 %v955, %v958
    %v960 = vmul.f32 %v959, 1.442695
    %v961 = vpow.pop %v960
    %v962 = vsel %vm162, %v961, 0.0
    %963 = vadd.xlane.f32.xlu0 %v962
    %v964 = vpop.xlane.xlu0 %963
    %v965 = vrcp.pop %v964
    %v966 = vmul.f32 %v961, %v965
    %967 = vrot.lane.b32.xlu0 %v158, 40
    %v968 = vpop.permute.xlu0 %967
    %v971 = vsel %vm162, %v966, 0
    %973 = vmatprep.subr.mxu0 0.0
    %974 = vmatpush1.msra.mxu0 %v968
    %975 = vmatprep.subr.mxu0 0.0
    %976 = vmatpush1.msra.mxu0 0.0
    %977 = vmatprep.subr.mxu0 0.0
    %978 = vmatpush1.msra.mxu0 0.0
    %979 = vmatprep.subr.mxu0 0.0
    %980 = vmatpush1.msra.mxu0 0.0
    %981 = vmatprep.subr.mxu0 0.0
    %982 = vmatpush1.msra.mxu0 0.0
    %983 = vmatprep.subr.mxu0 0.0
    %984 = vmatpush1.msra.mxu0 0.0
    %985 = vmatprep.subr.mxu0 0.0
    %986 = vmatpush1.msra.mxu0 0.0
    %987 = vmatprep.subr.mxu0 0.0
    %988 = vmatpush1.msra.mxu0 0.0
    %989 = vmatprep.subr.mxu0 0.0
    %990 = vmatpush1.msra.mxu0 0.0
    %991 = vmatprep.subr.mxu0 0.0
    %992 = vmatpush1.msra.mxu0 0.0
    %993 = vmatprep.subr.mxu0 0.0
    %994 = vmatpush1.msra.mxu0 0.0
    %995 = vmatprep.subr.mxu0 0.0
    %996 = vmatpush1.msra.mxu0 0.0
    %997 = vmatprep.subr.mxu0 0.0
    %998 = vmatpush1.msra.mxu0 0.0
    %999 = vmatprep.subr.mxu0 0.0
    %1000 = vmatpush1.msra.mxu0 0.0
    %1001 = vmatprep.subr.mxu0 0.0
    %1002 = vmatpush1.msra.mxu0 0.0
    %1003 = vmatprep.subr.mxu0 0.0
    %1004 = vmatpush1.msra.mxu0 0.0
    %1005 = vmatprep.subr.mxu0 0.0
    %1006 = vmatpush1.msra.mxu0 0.0
    %1007 = vmatprep.subr.mxu0 0.0
    %1008 = vmatpush1.msra.mxu0 0.0
    %1009 = vmatprep.subr.mxu0 0.0
    %1010 = vmatpush1.msra.mxu0 0.0
    %1011 = vmatprep.subr.mxu0 0.0
    %1012 = vmatpush1.msra.mxu0 0.0
    %1013 = vmatprep.subr.mxu0 0.0
    %1014 = vmatpush1.msra.mxu0 0.0
    %1015 = vmatprep.subr.mxu0 0.0
    %1016 = vmatpush1.msra.mxu0 0.0
    %1017 = vmatprep.subr.mxu0 0.0
    %1018 = vmatpush1.msra.mxu0 0.0
    %1019 = vmatprep.subr.mxu0 0.0
    %1020 = vmatpush1.msra.mxu0 0.0
    %1021 = vmatprep.subr.mxu0 0.0
    %1022 = vmatpush1.msra.mxu0 0.0
    %1023 = vmatprep.subr.mxu0 0.0
    %1024 = vmatpush1.msra.mxu0 0.0
    %1025 = vmatprep.subr.mxu0 0.0
    %1026 = vmatpush1.msra.mxu0 0.0
    %1027 = vmatprep.subr.mxu0 0.0
    %1028 = vmatpush1.msra.mxu0 0.0
    %1029 = vmatprep.subr.mxu0 0.0
    %1030 = vmatpush1.msra.mxu0 0.0
    %1031 = vmatprep.subr.mxu0 0.0
    %1032 = vmatpush1.msra.mxu0 0.0
    %1033 = vmatprep.subr.mxu0 0.0
    %1034 = vmatpush1.msra.mxu0 0.0
    %1035 = vmatprep.subr.mxu0 0.0
    %1036 = vmatpush1.msra.mxu0 0.0
    %1037 = vmatprep.mubr.f32.mxu0 0.0
    %1038 = vmatmul.mubr.f32.gmra.mrb[0].mxu0 %v971
    %v1039 = vpop.f32.mrb[0].mxu0
    %v1040 = vadd.f32 0.0, %v1039
    %v1041 = vpop.f32.mrb[0].mxu0
    %1042 = vdwg.mxu0
    %v1044 = vsel %vm162, %v1040, 0
    %1046 = vmatprep.subr.mxu0 0.0
    %1047 = vmatpush1.msra.mxu0 %v151
    %1048 = vmatprep.subr.mxu0 0.0
    %1049 = vmatpush1.msra.mxu0 0.0
    %1050 = vmatprep.subr.mxu0 0.0
    %1051 = vmatpush1.msra.mxu0 0.0
    %1052 = vmatprep.subr.mxu0 0.0
    %1053 = vmatpush1.msra.mxu0 0.0
    %1054 = vmatprep.subr.mxu0 0.0
    %1055 = vmatpush1.msra.mxu0 0.0
    %1056 = vmatprep.subr.mxu0 0.0
    %1057 = vmatpush1.msra.mxu0 0.0
    %1058 = vmatprep.subr.mxu0 0.0
    %1059 = vmatpush1.msra.mxu0 0.0
    %1060 = vmatprep.subr.mxu0 0.0
    %1061 = vmatpush1.msra.mxu0 0.0
    %1062 = vmatprep.subr.mxu0 0.0
    %1063 = vmatpush1.msra.mxu0 0.0
    %1064 = vmatprep.subr.mxu0 0.0
    %1065 = vmatpush1.msra.mxu0 0.0
    %1066 = vmatprep.subr.mxu0 0.0
    %1067 = vmatpush1.msra.mxu0 0.0
    %1068 = vmatprep.subr.mxu0 0.0
    %1069 = vmatpush1.msra.mxu0 0.0
    %1070 = vmatprep.subr.mxu0 0.0
    %1071 = vmatpush1.msra.mxu0 0.0
    %1072 = vmatprep.subr.mxu0 0.0
    %1073 = vmatpush1.msra.mxu0 0.0
    %1074 = vmatprep.subr.mxu0 0.0
    %1075 = vmatpush1.msra.mxu0 0.0
    %1076 = vmatprep.subr.mxu0 0.0
    %1077 = vmatpush1.msra.mxu0 0.0
    %1078 = vmatprep.subr.mxu0 0.0
    %1079 = vmatpush1.msra.mxu0 0.0
    %1080 = vmatprep.subr.mxu0 0.0
    %1081 = vmatpush1.msra.mxu0 0.0
    %1082 = vmatprep.subr.mxu0 0.0
    %1083 = vmatpush1.msra.mxu0 0.0
    %1084 = vmatprep.subr.mxu0 0.0
    %1085 = vmatpush1.msra.mxu0 0.0
    %1086 = vmatprep.subr.mxu0 0.0
    %1087 = vmatpush1.msra.mxu0 0.0
    %1088 = vmatprep.subr.mxu0 0.0
    %1089 = vmatpush1.msra.mxu0 0.0
    %1090 = vmatprep.subr.mxu0 0.0
    %1091 = vmatpush1.msra.mxu0 0.0
    %1092 = vmatprep.subr.mxu0 0.0
    %1093 = vmatpush1.msra.mxu0 0.0
    %1094 = vmatprep.subr.mxu0 0.0
    %1095 = vmatpush1.msra.mxu0 0.0
    %1096 = vmatprep.subr.mxu0 0.0
    %1097 = vmatpush1.msra.mxu0 0.0
    %1098 = vmatprep.subr.mxu0 0.0
    %1099 = vmatpush1.msra.mxu0 0.0
    %1100 = vmatprep.subr.mxu0 0.0
    %1101 = vmatpush1.msra.mxu0 0.0
    %1102 = vmatprep.subr.mxu0 0.0
    %1103 = vmatpush1.msra.mxu0 0.0
    %1104 = vmatprep.subr.mxu0 0.0
    %1105 = vmatpush1.msra.mxu0 0.0
    %1106 = vmatprep.subr.mxu0 0.0
    %1107 = vmatpush1.msra.mxu0 0.0
    %1108 = vmatprep.subr.mxu0 0.0
    %1109 = vmatpush1.msra.mxu0 0.0
    %1110 = vmatprep.mubr.f32.mxu0 0.0
    %1111 = vmatmul.mubr.f32.gmra.mrb[0].mxu0 %v1044
    %v1112 = vpop.f32.mrb[0].mxu0
    %v1113 = vadd.f32 0.0, %v1112
    %v1114 = vpop.f32.mrb[0].mxu0
    %1115 = vdwg.mxu0
    %v1116 = vadd.f32 %v876, %v1113
    %v1118 = vlaneseq
    %v1119 = vshrl.u32 %v1118, 7
    %v1120 = vsub.s32 0, %v1119
    %v1121 = vrot.slane %v152, %v1120
    %v1123 = vadd.f32 %v1116, %v1121
    %v1124 = vmax.f32 %v1123, 0.0
    %v1125 = vstv %s157
    %v1127 = vsel %vm65, %v1124, 0
    %1129 = vmatprep.subr.mxu0 0.0
    %1130 = vmatpush1.msra.mxu0 %v153
    %1131 = vmatprep.subr.mxu0 0.0
    %1132 = vmatpush1.msra.mxu0 %v154
    %1133 = vmatprep.subr.mxu0 0.0
    %1134 = vmatpush1.msra.mxu0 %v155
    %1135 = vmatprep.subr.mxu0 0.0
    %1136 = vmatpush1.msra.mxu0 %v156
    %1137 = vmatprep.subr.mxu0 0.0
    %1138 = vmatpush1.msra.mxu0 0.0
    %1139 = vmatprep.subr.mxu0 0.0
    %1140 = vmatpush1.msra.mxu0 0.0
    %1141 = vmatprep.subr.mxu0 0.0
    %1142 = vmatpush1.msra.mxu0 0.0
    %1143 = vmatprep.subr.mxu0 0.0
    %1144 = vmatpush1.msra.mxu0 0.0
    %1145 = vmatprep.subr.mxu0 0.0
    %1146 = vmatpush1.msra.mxu0 0.0
    %1147 = vmatprep.subr.mxu0 0.0
    %1148 = vmatpush1.msra.mxu0 0.0
    %1149 = vmatprep.subr.mxu0 0.0
    %1150 = vmatpush1.msra.mxu0 0.0
    %1151 = vmatprep.subr.mxu0 0.0
    %1152 = vmatpush1.msra.mxu0 0.0
    %1153 = vmatprep.subr.mxu0 0.0
    %1154 = vmatpush1.msra.mxu0 0.0
    %1155 = vmatprep.subr.mxu0 0.0
    %1156 = vmatpush1.msra.mxu0 0.0
    %1157 = vmatprep.subr.mxu0 0.0
    %1158 = vmatpush1.msra.mxu0 0.0
    %1159 = vmatprep.subr.mxu0 0.0
    %1160 = vmatpush1.msra.mxu0 0.0
    %1161 = vmatprep.subr.mxu0 0.0
    %1162 = vmatpush1.msra.mxu0 0.0
    %1163 = vmatprep.subr.mxu0 0.0
    %1164 = vmatpush1.msra.mxu0 0.0
    %1165 = vmatprep.subr.mxu0 0.0
    %1166 = vmatpush1.msra.mxu0 0.0
    %1167 = vmatprep.subr.mxu0 0.0
    %1168 = vmatpush1.msra.mxu0 0.0
    %1169 = vmatprep.subr.mxu0 0.0
    %1170 = vmatpush1.msra.mxu0 0.0
    %1171 = vmatprep.subr.mxu0 0.0
    %1172 = vmatpush1.msra.mxu0 0.0
    %1173 = vmatprep.subr.mxu0 0.0
    %1174 = vmatpush1.msra.mxu0 0.0
    %1175 = vmatprep.subr.mxu0 0.0
    %1176 = vmatpush1.msra.mxu0 0.0
    %1177 = vmatprep.subr.mxu0 0.0
    %1178 = vmatpush1.msra.mxu0 0.0
    %1179 = vmatprep.subr.mxu0 0.0
    %1180 = vmatpush1.msra.mxu0 0.0
    %1181 = vmatprep.subr.mxu0 0.0
    %1182 = vmatpush1.msra.mxu0 0.0
    %1183 = vmatprep.subr.mxu0 0.0
    %1184 = vmatpush1.msra.mxu0 0.0
    %1185 = vmatprep.subr.mxu0 0.0
    %1186 = vmatpush1.msra.mxu0 0.0
    %1187 = vmatprep.subr.mxu0 0.0
    %1188 = vmatpush1.msra.mxu0 0.0
    %1189 = vmatprep.subr.mxu0 0.0
    %1190 = vmatpush1.msra.mxu0 0.0
    %1191 = vmatprep.subr.mxu0 0.0
    %1192 = vmatpush1.msra.mxu0 0.0
    %1193 = vmatprep.mubr.f32.mxu0 0.0
    %1194 = vmatmul.mubr.f32.gmra.mrb[0].mxu0 %v1127
    %v1195 = vpop.f32.mrb[0].mxu0
    %v1196 = vadd.f32 %v1125, %v1195
    %v1197 = vpop.f32.mrb[0].mxu0
    %1198 = vdwg.mxu0
    %vm1199 = vcmask 7168
    %v1200 = vsel %vm1199, %v1196, -inf
    %v1201 = vrot.slane %v1200, 4
    %v1202 = vmax.f32 %v1200, %v1201
    %v1203 = vrot.slane %v1202, 2
    %v1204 = vmax.f32 %v1202, %v1203
    %v1205 = vrot.slane %v1204, 1
    %v1206 = vmax.f32 %v1204, %v1205
    %v1207 = vsub.f32 %v1196, %v1206
    %v1208 = vmul.f32 %v1207, 1.442695
    %v1209 = vpow.pop %v1208
    %v1210 = vsel %vm1199, %v1209, 0.0
    %v1211 = vrot.slane %v1210, 4
    %v1212 = vadd.f32 %v1210, %v1211
    %v1213 = vrot.slane %v1212, 2
    %v1214 = vadd.f32 %v1212, %v1213
    %v1215 = vrot.slane %v1214, 1
    %v1216 = vadd.f32 %v1214, %v1215
    %v1217 = vrcp.pop %v1216
    %v1218 = vmul.f32 %v1209, %v1217
    %1219 = vxpose.xlu0.b32.start [1/16] %v1218, 128
    %1220 = vxpose.xlu0.b32.cont [2/16] 0.0, 128
    %1221 = vxpose.xlu0.b32.cont [3/16] 0.0, 128
    %1222 = vxpose.xlu0.b32.cont [4/16] 0.0, 128
    %1223 = vxpose.xlu0.b32.cont [5/16] 0.0, 128
    %1224 = vxpose.xlu0.b32.cont [6/16] 0.0, 128
    %1225 = vxpose.xlu0.b32.cont [7/16] 0.0, 128
    %1226 = vxpose.xlu0.b32.cont [8/16] 0.0, 128
    %1227 = vxpose.xlu0.b32.cont [9/16] 0.0, 128
    %1228 = vxpose.xlu0.b32.cont [10/16] 0.0, 128
    %1229 = vxpose.xlu0.b32.cont [11/16] 0.0, 128
    %1230 = vxpose.xlu0.b32.cont [12/16] 0.0, 128
    %1231 = vxpose.xlu0.b32.cont [13/16] 0.0, 128
    %1232 = vxpose.xlu0.b32.cont [14/16] 0.0, 128
    %1233 = vxpose.xlu0.b32.cont [15/16] 0.0, 128
    %1234 = vxpose.xlu0.b32.end [16/16] 0.0, 128
    %v1235 = vpop.trf.xlu0
    %v1236 = vpop.trf.xlu0
    %v1237 = vpop.trf.xlu0
    %v1238 = vpop.trf.xlu0
    %v1239 = vpop.trf.xlu0
    %v1240 = vpop.trf.xlu0
    %v1241 = vpop.trf.xlu0
    %v1242 = vpop.trf.xlu0
    %v1243 = vpop.trf.xlu0
    %v1244 = vpop.trf.xlu0
    %v1245 = vpop.trf.xlu0
    %v1246 = vpop.trf.xlu0
    %v1247 = vpop.trf.xlu0
    %v1248 = vpop.trf.xlu0
    %v1249 = vpop.trf.xlu0
    %v1250 = vpop.trf.xlu0
    %v1252 = vsel %vm162, %v1235, 0
    %1254 = vmatprep.subr.mxu0 0.0
    %1255 = vmatpush1.msra.mxu0 %v1124
    %1256 = vmatprep.subr.mxu0 0.0
    %1257 = vmatpush1.msra.mxu0 0.0
    %1258 = vmatprep.subr.mxu0 0.0
    %1259 = vmatpush1.msra.mxu0 0.0
    %1260 = vmatprep.subr.mxu0 0.0
    %1261 = vmatpush1.msra.mxu0 0.0
    %1262 = vmatprep.subr.mxu0 0.0
    %1263 = vmatpush1.msra.mxu0 0.0
    %1264 = vmatprep.subr.mxu0 0.0
    %1265 = vmatpush1.msra.mxu0 0.0
    %1266 = vmatprep.subr.mxu0 0.0
    %1267 = vmatpush1.msra.mxu0 0.0
    %1268 = vmatprep.subr.mxu0 0.0
    %1269 = vmatpush1.msra.mxu0 0.0
    %1270 = vmatprep.subr.mxu0 0.0
    %1271 = vmatpush1.msra.mxu0 0.0
    %1272 = vmatprep.subr.mxu0 0.0
    %1273 = vmatpush1.msra.mxu0 0.0
    %1274 = vmatprep.subr.mxu0 0.0
    %1275 = vmatpush1.msra.mxu0 0.0
    %1276 = vmatprep.subr.mxu0 0.0
    %1277 = vmatpush1.msra.mxu0 0.0
    %1278 = vmatprep.subr.mxu0 0.0
    %1279 = vmatpush1.msra.mxu0 0.0
    %1280 = vmatprep.subr.mxu0 0.0
    %1281 = vmatpush1.msra.mxu0 0.0
    %1282 = vmatprep.subr.mxu0 0.0
    %1283 = vmatpush1.msra.mxu0 0.0
    %1284 = vmatprep.subr.mxu0 0.0
    %1285 = vmatpush1.msra.mxu0 0.0
    %1286 = vmatprep.subr.mxu0 0.0
    %1287 = vmatpush1.msra.mxu0 0.0
    %1288 = vmatprep.subr.mxu0 0.0
    %1289 = vmatpush1.msra.mxu0 0.0
    %1290 = vmatprep.subr.mxu0 0.0
    %1291 = vmatpush1.msra.mxu0 0.0
    %1292 = vmatprep.subr.mxu0 0.0
    %1293 = vmatpush1.msra.mxu0 0.0
    %1294 = vmatprep.subr.mxu0 0.0
    %1295 = vmatpush1.msra.mxu0 0.0
    %1296 = vmatprep.subr.mxu0 0.0
    %1297 = vmatpush1.msra.mxu0 0.0
    %1298 = vmatprep.subr.mxu0 0.0
    %1299 = vmatpush1.msra.mxu0 0.0
    %1300 = vmatprep.subr.mxu0 0.0
    %1301 = vmatpush1.msra.mxu0 0.0
    %1302 = vmatprep.subr.mxu0 0.0
    %1303 = vmatpush1.msra.mxu0 0.0
    %1304 = vmatprep.subr.mxu0 0.0
    %1305 = vmatpush1.msra.mxu0 0.0
    %1306 = vmatprep.subr.mxu0 0.0
    %1307 = vmatpush1.msra.mxu0 0.0
    %1308 = vmatprep.subr.mxu0 0.0
    %1309 = vmatpush1.msra.mxu0 0.0
    %1310 = vmatprep.subr.mxu0 0.0
    %1311 = vmatpush1.msra.mxu0 0.0
    %1312 = vmatprep.subr.mxu0 0.0
    %1313 = vmatpush1.msra.mxu0 0.0
    %1314 = vmatprep.subr.mxu0 0.0
    %1315 = vmatpush1.msra.mxu0 0.0
    %1316 = vmatprep.subr.mxu0 0.0
    %1317 = vmatpush1.msra.mxu0 0.0
    %1318 = vmatprep.mubr.f32.mxu0 0.0
    %1319 = vmatmul.mubr.f32.gmra.mrb[0].mxu0 %v1252
    %v1320 = vpop.f32.mrb[0].mxu0
    %v1321 = vadd.f32 0.0, %v1320
    %v1322 = vpop.f32.mrb[0].mxu0
    %1323 = vdwg.mxu0
    %v1324 = vadd.f32 %v144, %v147
    %1326 = vrot.lane.b32.xlu0 %v1324, 96
    %v1327 = vpop.permute.xlu0 %1326
    %v1328 = vsel %vm162, %v1324, 0
    %v1330 = vsel %vm162, %v1327, 0
    %1332 = vmatprep.subr.mxu0 0.0
    %1333 = vmatpush1.xpose.msra.mxu0 %v1330
    %1334 = vmatprep.subr.mxu0 0.0
    %1335 = vmatpush1.xpose.msra.mxu0 0.0
    %1336 = vmatprep.subr.mxu0 0.0
    %1337 = vmatpush1.xpose.msra.mxu0 0.0
    %1338 = vmatprep.subr.mxu0 0.0
    %1339 = vmatpush1.xpose.msra.mxu0 0.0
    %1340 = vmatprep.subr.mxu0 0.0
    %1341 = vmatpush1.xpose.msra.mxu0 0.0
    %1342 = vmatprep.subr.mxu0 0.0
    %1343 = vmatpush1.xpose.msra.mxu0 0.0
    %1344 = vmatprep.subr.mxu0 0.0
    %1345 = vmatpush1.xpose.msra.mxu0 0.0
    %1346 = vmatprep.subr.mxu0 0.0
    %1347 = vmatpush1.xpose.msra.mxu0 0.0
    %1348 = vmatprep.subr.mxu0 0.0
    %1349 = vmatpush1.xpose.msra.mxu0 0.0
    %1350 = vmatprep.subr.mxu0 0.0
    %1351 = vmatpush1.xpose.msra.mxu0 0.0
    %1352 = vmatprep.subr.mxu0 0.0
    %1353 = vmatpush1.xpose.msra.mxu0 0.0
    %1354 = vmatprep.subr.mxu0 0.0
    %1355 = vmatpush1.xpose.msra.mxu0 0.0
    %1356 = vmatprep.subr.mxu0 0.0
    %1357 = vmatpush1.xpose.msra.mxu0 0.0
    %1358 = vmatprep.subr.mxu0 0.0
    %1359 = vmatpush1.xpose.msra.mxu0 0.0
    %1360 = vmatprep.subr.mxu0 0.0
    %1361 = vmatpush1.xpose.msra.mxu0 0.0
    %1362 = vmatprep.subr.mxu0 0.0
    %1363 = vmatpush1.xpose.msra.mxu0 0.0
    %1364 = vmatprep.subr.mxu0 0.0
    %1365 = vmatpush1.xpose.msra.mxu0 0.0
    %1366 = vmatprep.subr.mxu0 0.0
    %1367 = vmatpush1.xpose.msra.mxu0 0.0
    %1368 = vmatprep.subr.mxu0 0.0
    %1369 = vmatpush1.xpose.msra.mxu0 0.0
    %1370 = vmatprep.subr.mxu0 0.0
    %1371 = vmatpush1.xpose.msra.mxu0 0.0
    %1372 = vmatprep.subr.mxu0 0.0
    %1373 = vmatpush1.xpose.msra.mxu0 0.0
    %1374 = vmatprep.subr.mxu0 0.0
    %1375 = vmatpush1.xpose.msra.mxu0 0.0
    %1376 = vmatprep.subr.mxu0 0.0
    %1377 = vmatpush1.xpose.msra.mxu0 0.0
    %1378 = vmatprep.subr.mxu0 0.0
    %1379 = vmatpush1.xpose.msra.mxu0 0.0
    %1380 = vmatprep.subr.mxu0 0.0
    %1381 = vmatpush1.xpose.msra.mxu0 0.0
    %1382 = vmatprep.subr.mxu0 0.0
    %1383 = vmatpush1.xpose.msra.mxu0 0.0
    %1384 = vmatprep.subr.mxu0 0.0
    %1385 = vmatpush1.xpose.msra.mxu0 0.0
    %1386 = vmatprep.subr.mxu0 0.0
    %1387 = vmatpush1.xpose.msra.mxu0 0.0
    %1388 = vmatprep.subr.mxu0 0.0
    %1389 = vmatpush1.xpose.msra.mxu0 0.0
    %1390 = vmatprep.subr.mxu0 0.0
    %1391 = vmatpush1.xpose.msra.mxu0 0.0
    %1392 = vmatprep.subr.mxu0 0.0
    %1393 = vmatpush1.xpose.msra.mxu0 0.0
    %1394 = vmatprep.subr.mxu0 0.0
    %1395 = vmatpush1.xpose.msra.mxu0 0.0
    %1396 = vmatprep.mubr.f32.mxu0 0.0
    %1397 = vmatmul.mubr.f32.gmra.mrb[0].mxu0 %v1328
    %v1398 = vpop.f32.mrb[0].mxu0
    %v1399 = vadd.f32 0.0, %v1398
    %v1400 = vpop.f32.mrb[0].mxu0
    %1401 = vdwg.mxu0
    %v1402 = vmul.f32 %v1399, 0.17677669
    %v1403 = vsel %vm162, %v1402, -inf
    %1404 = vmax.xlane.f32.xlu0 %v1403
    %v1405 = vpop.xlane.xlu0 %1404
    %v1406 = vsub.f32 %v1402, %v1405
    %v1407 = vmul.f32 %v1406, 1.442695
    %v1408 = vpow.pop %v1407
    %v1409 = vsel %vm162, %v1408, 0.0
    %1410 = vadd.xlane.f32.xlu0 %v1409
    %v1411 = vpop.xlane.xlu0 %1410
    %v1412 = vrcp.pop %v1411
    %v1413 = vmul.f32 %v1408, %v1412
    %1414 = vrot.lane.b32.xlu0 %v1324, 64
    %v1415 = vpop.permute.xlu0 %1414
    %v1418 = vsel %vm162, %v1413, 0
    %1420 = vmatprep.subr.mxu0 0.0
    %1421 = vmatpush1.msra.mxu0 %v1415
    %1422 = vmatprep.subr.mxu0 0.0
    %1423 = vmatpush1.msra.mxu0 0.0
    %1424 = vmatprep.subr.mxu0 0.0
    %1425 = vmatpush1.msra.mxu0 0.0
    %1426 = vmatprep.subr.mxu0 0.0
    %1427 = vmatpush1.msra.mxu0 0.0
    %1428 = vmatprep.subr.mxu0 0.0
    %1429 = vmatpush1.msra.mxu0 0.0
    %1430 = vmatprep.subr.mxu0 0.0
    %1431 = vmatpush1.msra.mxu0 0.0
    %1432 = vmatprep.subr.mxu0 0.0
    %1433 = vmatpush1.msra.mxu0 0.0
    %1434 = vmatprep.subr.mxu0 0.0
    %1435 = vmatpush1.msra.mxu0 0.0
    %1436 = vmatprep.subr.mxu0 0.0
    %1437 = vmatpush1.msra.mxu0 0.0
    %1438 = vmatprep.subr.mxu0 0.0
    %1439 = vmatpush1.msra.mxu0 0.0
    %1440 = vmatprep.subr.mxu0 0.0
    %1441 = vmatpush1.msra.mxu0 0.0
    %1442 = vmatprep.subr.mxu0 0.0
    %1443 = vmatpush1.msra.mxu0 0.0
    %1444 = vmatprep.subr.mxu0 0.0
    %1445 = vmatpush1.msra.mxu0 0.0
    %1446 = vmatprep.subr.mxu0 0.0
    %1447 = vmatpush1.msra.mxu0 0.0
    %1448 = vmatprep.subr.mxu0 0.0
    %1449 = vmatpush1.msra.mxu0 0.0
    %1450 = vmatprep.subr.mxu0 0.0
    %1451 = vmatpush1.msra.mxu0 0.0
    %1452 = vmatprep.subr.mxu0 0.0
    %1453 = vmatpush1.msra.mxu0 0.0
    %1454 = vmatprep.subr.mxu0 0.0
    %1455 = vmatpush1.msra.mxu0 0.0
    %1456 = vmatprep.subr.mxu0 0.0
    %1457 = vmatpush1.msra.mxu0 0.0
    %1458 = vmatprep.subr.mxu0 0.0
    %1459 = vmatpush1.msra.mxu0 0.0
    %1460 = vmatprep.subr.mxu0 0.0
    %1461 = vmatpush1.msra.mxu0 0.0
    %1462 = vmatprep.subr.mxu0 0.0
    %1463 = vmatpush1.msra.mxu0 0.0
    %1464 = vmatprep.subr.mxu0 0.0
    %1465 = vmatpush1.msra.mxu0 0.0
    %1466 = vmatprep.subr.mxu0 0.0
    %1467 = vmatpush1.msra.mxu0 0.0
    %1468 = vmatprep.subr.mxu0 0.0
    %1469 = vmatpush1.msra.mxu0 0.0
    %1470 = vmatprep.subr.mxu0 0.0
    %1471 = vmatpush1.msra.mxu0 0.0
    %1472 = vmatprep.subr.mxu0 0.0
    %1473 = vmatpush1.msra.mxu0 0.0
    %1474 = vmatprep.subr.mxu0 0.0
    %1475 = vmatpush1.msra.mxu0 0.0
    %1476 = vmatprep.subr.mxu0 0.0
    %1477 = vmatpush1.msra.mxu0 0.0
    %1478 = vmatprep.subr.mxu0 0.0
    %1479 = vmatpush1.msra.mxu0 0.0
    %1480 = vmatprep.subr.mxu0 0.0
    %1481 = vmatpush1.msra.mxu0 0.0
    %1482 = vmatprep.subr.mxu0 0.0
    %1483 = vmatpush1.msra.mxu0 0.0
    %1484 = vmatprep.mubr.f32.mxu0 0.0
    %1485 = vmatmul.mubr.f32.gmra.mrb[0].mxu0 %v1418
    %v1486 = vpop.f32.mrb[0].mxu0
    %v1487 = vadd.f32 0.0, %v1486
    %v1488 = vpop.f32.mrb[0].mxu0
    %1489 = vdwg.mxu0
    %1490 = vrot.lane.b32.xlu0 %v1324, 120
    %v1491 = vpop.permute.xlu0 %1490
    %1492 = vrot.lane.b32.xlu0 %v1324, 88
    %v1493 = vpop.permute.xlu0 %1492
    %v1494 = vsel %vm162, %v1491, 0
    %v1496 = vsel %vm162, %v1493, 0
    %1498 = vmatprep.subr.mxu0 0.0
    %1499 = vmatpush1.xpose.msra.mxu0 %v1496
    %1500 = vmatprep.subr.mxu0 0.0
    %1501 = vmatpush1.xpose.msra.mxu0 0.0
    %1502 = vmatprep.subr.mxu0 0.0
    %1503 = vmatpush1.xpose.msra.mxu0 0.0
    %1504 = vmatprep.subr.mxu0 0.0
    %1505 = vmatpush1.xpose.msra.mxu0 0.0
    %1506 = vmatprep.subr.mxu0 0.0
    %1507 = vmatpush1.xpose.msra.mxu0 0.0
    %1508 = vmatprep.subr.mxu0 0.0
    %1509 = vmatpush1.xpose.msra.mxu0 0.0
    %1510 = vmatprep.subr.mxu0 0.0
    %1511 = vmatpush1.xpose.msra.mxu0 0.0
    %1512 = vmatprep.subr.mxu0 0.0
    %1513 = vmatpush1.xpose.msra.mxu0 0.0
    %1514 = vmatprep.subr.mxu0 0.0
    %1515 = vmatpush1.xpose.msra.mxu0 0.0
    %1516 = vmatprep.subr.mxu0 0.0
    %1517 = vmatpush1.xpose.msra.mxu0 0.0
    %1518 = vmatprep.subr.mxu0 0.0
    %1519 = vmatpush1.xpose.msra.mxu0 0.0
    %1520 = vmatprep.subr.mxu0 0.0
    %1521 = vmatpush1.xpose.msra.mxu0 0.0
    %1522 = vmatprep.subr.mxu0 0.0
    %1523 = vmatpush1.xpose.msra.mxu0 0.0
    %1524 = vmatprep.subr.mxu0 0.0
    %1525 = vmatpush1.xpose.msra.mxu0 0.0
    %1526 = vmatprep.subr.mxu0 0.0
    %1527 = vmatpush1.xpose.msra.mxu0 0.0
    %1528 = vmatprep.subr.mxu0 0.0
    %1529 = vmatpush1.xpose.msra.mxu0 0.0
    %1530 = vmatprep.subr.mxu0 0.0
    %1531 = vmatpush1.xpose.msra.mxu0 0.0
    %1532 = vmatprep.subr.mxu0 0.0
    %1533 = vmatpush1.xpose.msra.mxu0 0.0
    %1534 = vmatprep.subr.mxu0 0.0
    %1535 = vmatpush1.xpose.msra.mxu0 0.0
    %1536 = vmatprep.subr.mxu0 0.0
    %1537 = vmatpush1.xpose.msra.mxu0 0.0
    %1538 = vmatprep.subr.mxu0 0.0
    %1539 = vmatpush1.xpose.msra.mxu0 0.0
    %1540 = vmatprep.subr.mxu0 0.0
    %1541 = vmatpush1.xpose.msra.mxu0 0.0
    %1542 = vmatprep.subr.mxu0 0.0
    %1543 = vmatpush1.xpose.msra.mxu0 0.0
    %1544 = vmatprep.subr.mxu0 0.0
    %1545 = vmatpush1.xpose.msra.mxu0 0.0
    %1546 = vmatprep.subr.mxu0 0.0
    %1547 = vmatpush1.xpose.msra.mxu0 0.0
    %1548 = vmatprep.subr.mxu0 0.0
    %1549 = vmatpush1.xpose.msra.mxu0 0.0
    %1550 = vmatprep.subr.mxu0 0.0
    %1551 = vmatpush1.xpose.msra.mxu0 0.0
    %1552 = vmatprep.subr.mxu0 0.0
    %1553 = vmatpush1.xpose.msra.mxu0 0.0
    %1554 = vmatprep.subr.mxu0 0.0
    %1555 = vmatpush1.xpose.msra.mxu0 0.0
    %1556 = vmatprep.subr.mxu0 0.0
    %1557 = vmatpush1.xpose.msra.mxu0 0.0
    %1558 = vmatprep.subr.mxu0 0.0
    %1559 = vmatpush1.xpose.msra.mxu0 0.0
    %1560 = vmatprep.subr.mxu0 0.0
    %1561 = vmatpush1.xpose.msra.mxu0 0.0
    %1562 = vmatprep.mubr.f32.mxu0 0.0
    %1563 = vmatmul.mubr.f32.gmra.mrb[0].mxu0 %v1494
    %v1564 = vpop.f32.mrb[0].mxu0
    %v1565 = vadd.f32 0.0, %v1564
    %v1566 = vpop.f32.mrb[0].mxu0
    %1567 = vdwg.mxu0
    %v1568 = vmul.f32 %v1565, 0.17677669
    %v1569 = vsel %vm162, %v1568, -inf
    %1570 = vmax.xlane.f32.xlu0 %v1569
    %v1571 = vpop.xlane.xlu0 %1570
    %v1572 = vsub.f32 %v1568, %v1571
    %v1573 = vmul.f32 %v1572, 1.442695
    %v1574 = vpow.pop %v1573
    %v1575 = vsel %vm162, %v1574, 0.0
    %1576 = vadd.xlane.f32.xlu0 %v1575
    %v1577 = vpop.xlane.xlu0 %1576
    %v1578 = vrcp.pop %v1577
    %v1579 = vmul.f32 %v1574, %v1578
    %1580 = vrot.lane.b32.xlu0 %v1324, 56
    %v1581 = vpop.permute.xlu0 %1580
    %v1584 = vsel %vm162, %v1579, 0
    %1586 = vmatprep.subr.mxu0 0.0
    %1587 = vmatpush1.msra.mxu0 %v1581
    %1588 = vmatprep.subr.mxu0 0.0
    %1589 = vmatpush1.msra.mxu0 0.0
    %1590 = vmatprep.subr.mxu0 0.0
    %1591 = vmatpush1.msra.mxu0 0.0
    %1592 = vmatprep.subr.mxu0 0.0
    %1593 = vmatpush1.msra.mxu0 0.0
    %1594 = vmatprep.subr.mxu0 0.0
    %1595 = vmatpush1.msra.mxu0 0.0
    %1596 = vmatprep.subr.mxu0 0.0
    %1597 = vmatpush1.msra.mxu0 0.0
    %1598 = vmatprep.subr.mxu0 0.0
    %1599 = vmatpush1.msra.mxu0 0.0
    %1600 = vmatprep.subr.mxu0 0.0
    %1601 = vmatpush1.msra.mxu0 0.0
    %1602 = vmatprep.subr.mxu0 0.0
    %1603 = vmatpush1.msra.mxu0 0.0
    %1604 = vmatprep.subr.mxu0 0.0
    %1605 = vmatpush1.msra.mxu0 0.0
    %1606 = vmatprep.subr.mxu0 0.0
    %1607 = vmatpush1.msra.mxu0 0.0
    %1608 = vmatprep.subr.mxu0 0.0
    %1609 = vmatpush1.msra.mxu0 0.0
    %1610 = vmatprep.subr.mxu0 0.0
    %1611 = vmatpush1.msra.mxu0 0.0
    %1612 = vmatprep.subr.mxu0 0.0
    %1613 = vmatpush1.msra.mxu0 0.0
    %1614 = vmatprep.subr.mxu0 0.0
    %1615 = vmatpush1.msra.mxu0 0.0
    %1616 = vmatprep.subr.mxu0 0.0
    %1617 = vmatpush1.msra.mxu0 0.0
    %1618 = vmatprep.subr.mxu0 0.0
    %1619 = vmatpush1.msra.mxu0 0.0
    %1620 = vmatprep.subr.mxu0 0.0
    %1621 = vmatpush1.msra.mxu0 0.0
    %1622 = vmatprep.subr.mxu0 0.0
    %1623 = vmatpush1.msra.mxu0 0.0
    %1624 = vmatprep.subr.mxu0 0.0
    %1625 = vmatpush1.msra.mxu0 0.0
    %1626 = vmatprep.subr.mxu0 0.0
    %1627 = vmatpush1.msra.mxu0 0.0
    %1628 = vmatprep.subr.mxu0 0.0
    %1629 = vmatpush1.msra.mxu0 0.0
    %1630 = vmatprep.subr.mxu0 0.0
    %1631 = vmatpush1.msra.mxu0 0.0
    %1632 = vmatprep.subr.mxu0 0.0
    %1633 = vmatpush1.msra.mxu0 0.0
    %1634 = vmatprep.subr.mxu0 0.0
    %1635 = vmatpush1.msra.mxu0 0.0
    %1636 = vmatprep.subr.mxu0 0.0
    %1637 = vmatpush1.msra.mxu0 0.0
    %1638 = vmatprep.subr.mxu0 0.0
    %1639 = vmatpush1.msra.mxu0 0.0
    %1640 = vmatprep.subr.mxu0 0.0
    %1641 = vmatpush1.msra.mxu0 0.0
    %1642 = vmatprep.subr.mxu0 0.0
    %1643 = vmatpush1.msra.mxu0 0.0
    %1644 = vmatprep.subr.mxu0 0.0
    %1645 = vmatpush1.msra.mxu0 0.0
    %1646 = vmatprep.subr.mxu0 0.0
    %1647 = vmatpush1.msra.mxu0 0.0
    %1648 = vmatprep.subr.mxu0 0.0
    %1649 = vmatpush1.msra.mxu0 0.0
    %1650 = vmatprep.mubr.f32.mxu0 0.0
    %1651 = vmatmul.mubr.f32.gmra.mrb[0].mxu0 %v1584
    %v1652 = vpop.f32.mrb[0].mxu0
    %v1653 = vadd.f32 0.0, %v1652
    %v1654 = vpop.f32.mrb[0].mxu0
    %1655 = vdwg.mxu0
    %v1657 = vsel %vm162, %v1653, 0
    %1659 = vmatprep.subr.mxu0 0.0
    %1660 = vmatpush1.msra.mxu0 %v149
    %1661 = vmatprep.subr.mxu0 0.0
    %1662 = vmatpush1.msra.mxu0 0.0
    %1663 = vmatprep.subr.mxu0 0.0
    %1664 = vmatpush1.msra.mxu0 0.0
    %1665 = vmatprep.subr.mxu0 0.0
    %1666 = vmatpush1.msra.mxu0 0.0
    %1667 = vmatprep.subr.mxu0 0.0
    %1668 = vmatpush1.msra.mxu0 0.0
    %1669 = vmatprep.subr.mxu0 0.0
    %1670 = vmatpush1.msra.mxu0 0.0
    %1671 = vmatprep.subr.mxu0 0.0
    %1672 = vmatpush1.msra.mxu0 0.0
    %1673 = vmatprep.subr.mxu0 0.0
    %1674 = vmatpush1.msra.mxu0 0.0
    %1675 = vmatprep.subr.mxu0 0.0
    %1676 = vmatpush1.msra.mxu0 0.0
    %1677 = vmatprep.subr.mxu0 0.0
    %1678 = vmatpush1.msra.mxu0 0.0
    %1679 = vmatprep.subr.mxu0 0.0
    %1680 = vmatpush1.msra.mxu0 0.0
    %1681 = vmatprep.subr.mxu0 0.0
    %1682 = vmatpush1.msra.mxu0 0.0
    %1683 = vmatprep.subr.mxu0 0.0
    %1684 = vmatpush1.msra.mxu0 0.0
    %1685 = vmatprep.subr.mxu0 0.0
    %1686 = vmatpush1.msra.mxu0 0.0
    %1687 = vmatprep.subr.mxu0 0.0
    %1688 = vmatpush1.msra.mxu0 0.0
    %1689 = vmatprep.subr.mxu0 0.0
    %1690 = vmatpush1.msra.mxu0 0.0
    %1691 = vmatprep.subr.mxu0 0.0
    %1692 = vmatpush1.msra.mxu0 0.0
    %1693 = vmatprep.subr.mxu0 0.0
    %1694 = vmatpush1.msra.mxu0 0.0
    %1695 = vmatprep.subr.mxu0 0.0
    %1696 = vmatpush1.msra.mxu0 0.0
    %1697 = vmatprep.subr.mxu0 0.0
    %1698 = vmatpush1.msra.mxu0 0.0
    %1699 = vmatprep.subr.mxu0 0.0
    %1700 = vmatpush1.msra.mxu0 0.0
    %1701 = vmatprep.subr.mxu0 0.0
    %1702 = vmatpush1.msra.mxu0 0.0
    %1703 = vmatprep.subr.mxu0 0.0
    %1704 = vmatpush1.msra.mxu0 0.0
    %1705 = vmatprep.subr.mxu0 0.0
    %1706 = vmatpush1.msra.mxu0 0.0
    %1707 = vmatprep.subr.mxu0 0.0
    %1708 = vmatpush1.msra.mxu0 0.0
    %1709 = vmatprep.subr.mxu0 0.0
    %1710 = vmatpush1.msra.mxu0 0.0
    %1711 = vmatprep.subr.mxu0 0.0
    %1712 = vmatpush1.msra.mxu0 0.0
    %1713 = vmatprep.subr.mxu0 0.0
    %1714 = vmatpush1.msra.mxu0 0.0
    %1715 = vmatprep.subr.mxu0 0.0
    %1716 = vmatpush1.msra.mxu0 0.0
    %1717 = vmatprep.subr.mxu0 0.0
    %1718 = vmatpush1.msra.mxu0 0.0
    %1719 = vmatprep.subr.mxu0 0.0
    %1720 = vmatpush1.msra.mxu0 0.0
    %1721 = vmatprep.subr.mxu0 0.0
    %1722 = vmatpush1.msra.mxu0 0.0
    %1723 = vmatprep.mubr.f32.mxu0 0.0
    %1724 = vmatmul.mubr.f32.gmra.mrb[0].mxu0 %v1657
    %v1725 = vpop.f32.mrb[0].mxu0
    %v1726 = vadd.f32 0.0, %v1725
    %v1727 = vpop.f32.mrb[0].mxu0
    %1728 = vdwg.mxu0
    %v1730 = vsel %vm162, %v1487, 0
    %1732 = vmatprep.subr.mxu0 0.0
    %1733 = vmatpush1.msra.mxu0 %v148
    %1734 = vmatprep.subr.mxu0 0.0
    %1735 = vmatpush1.msra.mxu0 0.0
    %1736 = vmatprep.subr.mxu0 0.0
    %1737 = vmatpush1.msra.mxu0 0.0
    %1738 = vmatprep.subr.mxu0 0.0
    %1739 = vmatpush1.msra.mxu0 0.0
    %1740 = vmatprep.subr.mxu0 0.0
    %1741 = vmatpush1.msra.mxu0 0.0
    %1742 = vmatprep.subr.mxu0 0.0
    %1743 = vmatpush1.msra.mxu0 0.0
    %1744 = vmatprep.subr.mxu0 0.0
    %1745 = vmatpush1.msra.mxu0 0.0
    %1746 = vmatprep.subr.mxu0 0.0
    %1747 = vmatpush1.msra.mxu0 0.0
    %1748 = vmatprep.subr.mxu0 0.0
    %1749 = vmatpush1.msra.mxu0 0.0
    %1750 = vmatprep.subr.mxu0 0.0
    %1751 = vmatpush1.msra.mxu0 0.0
    %1752 = vmatprep.subr.mxu0 0.0
    %1753 = vmatpush1.msra.mxu0 0.0
    %1754 = vmatprep.subr.mxu0 0.0
    %1755 = vmatpush1.msra.mxu0 0.0
    %1756 = vmatprep.subr.mxu0 0.0
    %1757 = vmatpush1.msra.mxu0 0.0
    %1758 = vmatprep.subr.mxu0 0.0
    %1759 = vmatpush1.msra.mxu0 0.0
    %1760 = vmatprep.subr.mxu0 0.0
    %1761 = vmatpush1.msra.mxu0 0.0
    %1762 = vmatprep.subr.mxu0 0.0
    %1763 = vmatpush1.msra.mxu0 0.0
    %1764 = vmatprep.subr.mxu0 0.0
    %1765 = vmatpush1.msra.mxu0 0.0
    %1766 = vmatprep.subr.mxu0 0.0
    %1767 = vmatpush1.msra.mxu0 0.0
    %1768 = vmatprep.subr.mxu0 0.0
    %1769 = vmatpush1.msra.mxu0 0.0
    %1770 = vmatprep.subr.mxu0 0.0
    %1771 = vmatpush1.msra.mxu0 0.0
    %1772 = vmatprep.subr.mxu0 0.0
    %1773 = vmatpush1.msra.mxu0 0.0
    %1774 = vmatprep.subr.mxu0 0.0
    %1775 = vmatpush1.msra.mxu0 0.0
    %1776 = vmatprep.subr.mxu0 0.0
    %1777 = vmatpush1.msra.mxu0 0.0
    %1778 = vmatprep.subr.mxu0 0.0
    %1779 = vmatpush1.msra.mxu0 0.0
    %1780 = vmatprep.subr.mxu0 0.0
    %1781 = vmatpush1.msra.mxu0 0.0
    %1782 = vmatprep.subr.mxu0 0.0
    %1783 = vmatpush1.msra.mxu0 0.0
    %1784 = vmatprep.subr.mxu0 0.0
    %1785 = vmatpush1.msra.mxu0 0.0
    %1786 = vmatprep.subr.mxu0 0.0
    %1787 = vmatpush1.msra.mxu0 0.0
    %1788 = vmatprep.subr.mxu0 0.0
    %1789 = vmatpush1.msra.mxu0 0.0
    %1790 = vmatprep.subr.mxu0 0.0
    %1791 = vmatpush1.msra.mxu0 0.0
    %1792 = vmatprep.subr.mxu0 0.0
    %1793 = vmatpush1.msra.mxu0 0.0
    %1794 = vmatprep.subr.mxu0 0.0
    %1795 = vmatpush1.msra.mxu0 0.0
    %1796 = vmatprep.mubr.f32.mxu0 0.0
    %1797 = vmatmul.mubr.f32.gmra.mrb[0].mxu0 %v1730
    %v1798 = vpop.f32.mrb[0].mxu0
    %v1799 = vadd.f32 %v1726, %v1798
    %v1800 = vpop.f32.mrb[0].mxu0
    %1801 = vdwg.mxu0
    %1802 = vrot.lane.b32.xlu0 %v1324, 112
    %v1803 = vpop.permute.xlu0 %1802
    %1804 = vrot.lane.b32.xlu0 %v1324, 80
    %v1805 = vpop.permute.xlu0 %1804
    %v1806 = vsel %vm162, %v1803, 0
    %v1808 = vsel %vm162, %v1805, 0
    %1810 = vmatprep.subr.mxu0 0.0
    %1811 = vmatpush1.xpose.msra.mxu0 %v1808
    %1812 = vmatprep.subr.mxu0 0.0
    %1813 = vmatpush1.xpose.msra.mxu0 0.0
    %1814 = vmatprep.subr.mxu0 0.0
    %1815 = vmatpush1.xpose.msra.mxu0 0.0
    %1816 = vmatprep.subr.mxu0 0.0
    %1817 = vmatpush1.xpose.msra.mxu0 0.0
    %1818 = vmatprep.subr.mxu0 0.0
    %1819 = vmatpush1.xpose.msra.mxu0 0.0
    %1820 = vmatprep.subr.mxu0 0.0
    %1821 = vmatpush1.xpose.msra.mxu0 0.0
    %1822 = vmatprep.subr.mxu0 0.0
    %1823 = vmatpush1.xpose.msra.mxu0 0.0
    %1824 = vmatprep.subr.mxu0 0.0
    %1825 = vmatpush1.xpose.msra.mxu0 0.0
    %1826 = vmatprep.subr.mxu0 0.0
    %1827 = vmatpush1.xpose.msra.mxu0 0.0
    %1828 = vmatprep.subr.mxu0 0.0
    %1829 = vmatpush1.xpose.msra.mxu0 0.0
    %1830 = vmatprep.subr.mxu0 0.0
    %1831 = vmatpush1.xpose.msra.mxu0 0.0
    %1832 = vmatprep.subr.mxu0 0.0
    %1833 = vmatpush1.xpose.msra.mxu0 0.0
    %1834 = vmatprep.subr.mxu0 0.0
    %1835 = vmatpush1.xpose.msra.mxu0 0.0
    %1836 = vmatprep.subr.mxu0 0.0
    %1837 = vmatpush1.xpose.msra.mxu0 0.0
    %1838 = vmatprep.subr.mxu0 0.0
    %1839 = vmatpush1.xpose.msra.mxu0 0.0
    %1840 = vmatprep.subr.mxu0 0.0
    %1841 = vmatpush1.xpose.msra.mxu0 0.0
    %1842 = vmatprep.subr.mxu0 0.0
    %1843 = vmatpush1.xpose.msra.mxu0 0.0
    %1844 = vmatprep.subr.mxu0 0.0
    %1845 = vmatpush1.xpose.msra.mxu0 0.0
    %1846 = vmatprep.subr.mxu0 0.0
    %1847 = vmatpush1.xpose.msra.mxu0 0.0
    %1848 = vmatprep.subr.mxu0 0.0
    %1849 = vmatpush1.xpose.msra.mxu0 0.0
    %1850 = vmatprep.subr.mxu0 0.0
    %1851 = vmatpush1.xpose.msra.mxu0 0.0
    %1852 = vmatprep.subr.mxu0 0.0
    %1853 = vmatpush1.xpose.msra.mxu0 0.0
    %1854 = vmatprep.subr.mxu0 0.0
    %1855 = vmatpush1.xpose.msra.mxu0 0.0
    %1856 = vmatprep.subr.mxu0 0.0
    %1857 = vmatpush1.xpose.msra.mxu0 0.0
    %1858 = vmatprep.subr.mxu0 0.0
    %1859 = vmatpush1.xpose.msra.mxu0 0.0
    %1860 = vmatprep.subr.mxu0 0.0
    %1861 = vmatpush1.xpose.msra.mxu0 0.0
    %1862 = vmatprep.subr.mxu0 0.0
    %1863 = vmatpush1.xpose.msra.mxu0 0.0
    %1864 = vmatprep.subr.mxu0 0.0
    %1865 = vmatpush1.xpose.msra.mxu0 0.0
    %1866 = vmatprep.subr.mxu0 0.0
    %1867 = vmatpush1.xpose.msra.mxu0 0.0
    %1868 = vmatprep.subr.mxu0 0.0
    %1869 = vmatpush1.xpose.msra.mxu0 0.0
    %1870 = vmatprep.subr.mxu0 0.0
    %1871 = vmatpush1.xpose.msra.mxu0 0.0
    %1872 = vmatprep.subr.mxu0 0.0
    %1873 = vmatpush1.xpose.msra.mxu0 0.0
    %1874 = vmatprep.mubr.f32.mxu0 0.0
    %1875 = vmatmul.mubr.f32.gmra.mrb[0].mxu0 %v1806
    %v1876 = vpop.f32.mrb[0].mxu0
    %v1877 = vadd.f32 0.0, %v1876
    %v1878 = vpop.f32.mrb[0].mxu0
    %1879 = vdwg.mxu0
    %v1880 = vmul.f32 %v1877, 0.17677669
    %v1881 = vsel %vm162, %v1880, -inf
    %1882 = vmax.xlane.f32.xlu0 %v1881
    %v1883 = vpop.xlane.xlu0 %1882
    %v1884 = vsub.f32 %v1880, %v1883
    %v1885 = vmul.f32 %v1884, 1.442695
    %v1886 = vpow.pop %v1885
    %v1887 = vsel %vm162, %v1886, 0.0
    %1888 = vadd.xlane.f32.xlu0 %v1887
    %v1889 = vpop.xlane.xlu0 %1888
    %v1890 = vrcp.pop %v1889
    %v1891 = vmul.f32 %v1886, %v1890
    %1892 = vrot.lane.b32.xlu0 %v1324, 48
    %v1893 = vpop.permute.xlu0 %1892
    %v1896 = vsel %vm162, %v1891, 0
    %1898 = vmatprep.subr.mxu0 0.0
    %1899 = vmatpush1.msra.mxu0 %v1893
    %1900 = vmatprep.subr.mxu0 0.0
    %1901 = vmatpush1.msra.mxu0 0.0
    %1902 = vmatprep.subr.mxu0 0.0
    %1903 = vmatpush1.msra.mxu0 0.0
    %1904 = vmatprep.subr.mxu0 0.0
    %1905 = vmatpush1.msra.mxu0 0.0
    %1906 = vmatprep.subr.mxu0 0.0
    %1907 = vmatpush1.msra.mxu0 0.0
    %1908 = vmatprep.subr.mxu0 0.0
    %1909 = vmatpush1.msra.mxu0 0.0
    %1910 = vmatprep.subr.mxu0 0.0
    %1911 = vmatpush1.msra.mxu0 0.0
    %1912 = vmatprep.subr.mxu0 0.0
    %1913 = vmatpush1.msra.mxu0 0.0
    %1914 = vmatprep.subr.mxu0 0.0
    %1915 = vmatpush1.msra.mxu0 0.0
    %1916 = vmatprep.subr.mxu0 0.0
    %1917 = vmatpush1.msra.mxu0 0.0
    %1918 = vmatprep.subr.mxu0 0.0
    %1919 = vmatpush1.msra.mxu0 0.0
    %1920 = vmatprep.subr.mxu0 0.0
    %1921 = vmatpush1.msra.mxu0 0.0
    %1922 = vmatprep.subr.mxu0 0.0
    %1923 = vmatpush1.msra.mxu0 0.0
    %1924 = vmatprep.subr.mxu0 0.0
    %1925 = vmatpush1.msra.mxu0 0.0
    %1926 = vmatprep.subr.mxu0 0.0
    %1927 = vmatpush1.msra.mxu0 0.0
    %1928 = vmatprep.subr.mxu0 0.0
    %1929 = vmatpush1.msra.mxu0 0.0
    %1930 = vmatprep.subr.mxu0 0.0
    %1931 = vmatpush1.msra.mxu0 0.0
    %1932 = vmatprep.subr.mxu0 0.0
    %1933 = vmatpush1.msra.mxu0 0.0
    %1934 = vmatprep.subr.mxu0 0.0
    %1935 = vmatpush1.msra.mxu0 0.0
    %1936 = vmatprep.subr.mxu0 0.0
    %1937 = vmatpush1.msra.mxu0 0.0
    %1938 = vmatprep.subr.mxu0 0.0
    %1939 = vmatpush1.msra.mxu0 0.0
    %1940 = vmatprep.subr.mxu0 0.0
    %1941 = vmatpush1.msra.mxu0 0.0
    %1942 = vmatprep.subr.mxu0 0.0
    %1943 = vmatpush1.msra.mxu0 0.0
    %1944 = vmatprep.subr.mxu0 0.0
    %1945 = vmatpush1.msra.mxu0 0.0
    %1946 = vmatprep.subr.mxu0 0.0
    %1947 = vmatpush1.msra.mxu0 0.0
    %1948 = vmatprep.subr.mxu0 0.0
    %1949 = vmatpush1.msra.mxu0 0.0
    %1950 = vmatprep.subr.mxu0 0.0
    %1951 = vmatpush1.msra.mxu0 0.0
    %1952 = vmatprep.subr.mxu0 0.0
    %1953 = vmatpush1.msra.mxu0 0.0
    %1954 = vmatprep.subr.mxu0 0.0
    %1955 = vmatpush1.msra.mxu0 0.0
    %1956 = vmatprep.subr.mxu0 0.0
    %1957 = vmatpush1.msra.mxu0 0.0
    %1958 = vmatprep.subr.mxu0 0.0
    %1959 = vmatpush1.msra.mxu0 0.0
    %1960 = vmatprep.subr.mxu0 0.0
    %1961 = vmatpush1.msra.mxu0 0.0
    %1962 = vmatprep.mubr.f32.mxu0 0.0
    %1963 = vmatmul.mubr.f32.gmra.mrb[0].mxu0 %v1896
    %v1964 = vpop.f32.mrb[0].mxu0
    %v1965 = vadd.f32 0.0, %v1964
    %v1966 = vpop.f32.mrb[0].mxu0
    %1967 = vdwg.mxu0
    %v1969 = vsel %vm162, %v1965, 0
    %1971 = vmatprep.subr.mxu0 0.0
    %1972 = vmatpush1.msra.mxu0 %v150
    %1973 = vmatprep.subr.mxu0 0.0
    %1974 = vmatpush1.msra.mxu0 0.0
    %1975 = vmatprep.subr.mxu0 0.0
    %1976 = vmatpush1.msra.mxu0 0.0
    %1977 = vmatprep.subr.mxu0 0.0
    %1978 = vmatpush1.msra.mxu0 0.0
    %1979 = vmatprep.subr.mxu0 0.0
    %1980 = vmatpush1.msra.mxu0 0.0
    %1981 = vmatprep.subr.mxu0 0.0
    %1982 = vmatpush1.msra.mxu0 0.0
    %1983 = vmatprep.subr.mxu0 0.0
    %1984 = vmatpush1.msra.mxu0 0.0
    %1985 = vmatprep.subr.mxu0 0.0
    %1986 = vmatpush1.msra.mxu0 0.0
    %1987 = vmatprep.subr.mxu0 0.0
    %1988 = vmatpush1.msra.mxu0 0.0
    %1989 = vmatprep.subr.mxu0 0.0
    %1990 = vmatpush1.msra.mxu0 0.0
    %1991 = vmatprep.subr.mxu0 0.0
    %1992 = vmatpush1.msra.mxu0 0.0
    %1993 = vmatprep.subr.mxu0 0.0
    %1994 = vmatpush1.msra.mxu0 0.0
    %1995 = vmatprep.subr.mxu0 0.0
    %1996 = vmatpush1.msra.mxu0 0.0
    %1997 = vmatprep.subr.mxu0 0.0
    %1998 = vmatpush1.msra.mxu0 0.0
    %1999 = vmatprep.subr.mxu0 0.0
    %2000 = vmatpush1.msra.mxu0 0.0
    %2001 = vmatprep.subr.mxu0 0.0
    %2002 = vmatpush1.msra.mxu0 0.0
    %2003 = vmatprep.subr.mxu0 0.0
    %2004 = vmatpush1.msra.mxu0 0.0
    %2005 = vmatprep.subr.mxu0 0.0
    %2006 = vmatpush1.msra.mxu0 0.0
    %2007 = vmatprep.subr.mxu0 0.0
    %2008 = vmatpush1.msra.mxu0 0.0
    %2009 = vmatprep.subr.mxu0 0.0
    %2010 = vmatpush1.msra.mxu0 0.0
    %2011 = vmatprep.subr.mxu0 0.0
    %2012 = vmatpush1.msra.mxu0 0.0
    %2013 = vmatprep.subr.mxu0 0.0
    %2014 = vmatpush1.msra.mxu0 0.0
    %2015 = vmatprep.subr.mxu0 0.0
    %2016 = vmatpush1.msra.mxu0 0.0
    %2017 = vmatprep.subr.mxu0 0.0
    %2018 = vmatpush1.msra.mxu0 0.0
    %2019 = vmatprep.subr.mxu0 0.0
    %2020 = vmatpush1.msra.mxu0 0.0
    %2021 = vmatprep.subr.mxu0 0.0
    %2022 = vmatpush1.msra.mxu0 0.0
    %2023 = vmatprep.subr.mxu0 0.0
    %2024 = vmatpush1.msra.mxu0 0.0
    %2025 = vmatprep.subr.mxu0 0.0
    %2026 = vmatpush1.msra.mxu0 0.0
    %2027 = vmatprep.subr.mxu0 0.0
    %2028 = vmatpush1.msra.mxu0 0.0
    %2029 = vmatprep.subr.mxu0 0.0
    %2030 = vmatpush1.msra.mxu0 0.0
    %2031 = vmatprep.subr.mxu0 0.0
    %2032 = vmatpush1.msra.mxu0 0.0
    %2033 = vmatprep.subr.mxu0 0.0
    %2034 = vmatpush1.msra.mxu0 0.0
    %2035 = vmatprep.mubr.f32.mxu0 0.0
    %2036 = vmatmul.mubr.f32.gmra.mrb[0].mxu0 %v1969
    %v2037 = vpop.f32.mrb[0].mxu0
    %v2038 = vadd.f32 0.0, %v2037
    %v2039 = vpop.f32.mrb[0].mxu0
    %2040 = vdwg.mxu0
    %v2041 = vadd.f32 %v1799, %v2038
    %2042 = vrot.lane.b32.xlu0 %v1324, 104
    %v2043 = vpop.permute.xlu0 %2042
    %2044 = vrot.lane.b32.xlu0 %v1324, 72
    %v2045 = vpop.permute.xlu0 %2044
    %v2046 = vsel %vm162, %v2043, 0
    %v2048 = vsel %vm162, %v2045, 0
    %2050 = vmatprep.subr.mxu0 0.0
    %2051 = vmatpush1.xpose.msra.mxu0 %v2048
    %2052 = vmatprep.subr.mxu0 0.0
    %2053 = vmatpush1.xpose.msra.mxu0 0.0
    %2054 = vmatprep.subr.mxu0 0.0
    %2055 = vmatpush1.xpose.msra.mxu0 0.0
    %2056 = vmatprep.subr.mxu0 0.0
    %2057 = vmatpush1.xpose.msra.mxu0 0.0
    %2058 = vmatprep.subr.mxu0 0.0
    %2059 = vmatpush1.xpose.msra.mxu0 0.0
    %2060 = vmatprep.subr.mxu0 0.0
    %2061 = vmatpush1.xpose.msra.mxu0 0.0
    %2062 = vmatprep.subr.mxu0 0.0
    %2063 = vmatpush1.xpose.msra.mxu0 0.0
    %2064 = vmatprep.subr.mxu0 0.0
    %2065 = vmatpush1.xpose.msra.mxu0 0.0
    %2066 = vmatprep.subr.mxu0 0.0
    %2067 = vmatpush1.xpose.msra.mxu0 0.0
    %2068 = vmatprep.subr.mxu0 0.0
    %2069 = vmatpush1.xpose.msra.mxu0 0.0
    %2070 = vmatprep.subr.mxu0 0.0
    %2071 = vmatpush1.xpose.msra.mxu0 0.0
    %2072 = vmatprep.subr.mxu0 0.0
    %2073 = vmatpush1.xpose.msra.mxu0 0.0
    %2074 = vmatprep.subr.mxu0 0.0
    %2075 = vmatpush1.xpose.msra.mxu0 0.0
    %2076 = vmatprep.subr.mxu0 0.0
    %2077 = vmatpush1.xpose.msra.mxu0 0.0
    %2078 = vmatprep.subr.mxu0 0.0
    %2079 = vmatpush1.xpose.msra.mxu0 0.0
    %2080 = vmatprep.subr.mxu0 0.0
    %2081 = vmatpush1.xpose.msra.mxu0 0.0
    %2082 = vmatprep.subr.mxu0 0.0
    %2083 = vmatpush1.xpose.msra.mxu0 0.0
    %2084 = vmatprep.subr.mxu0 0.0
    %2085 = vmatpush1.xpose.msra.mxu0 0.0
    %2086 = vmatprep.subr.mxu0 0.0
    %2087 = vmatpush1.xpose.msra.mxu0 0.0
    %2088 = vmatprep.subr.mxu0 0.0
    %2089 = vmatpush1.xpose.msra.mxu0 0.0
    %2090 = vmatprep.subr.mxu0 0.0
    %2091 = vmatpush1.xpose.msra.mxu0 0.0
    %2092 = vmatprep.subr.mxu0 0.0
    %2093 = vmatpush1.xpose.msra.mxu0 0.0
    %2094 = vmatprep.subr.mxu0 0.0
    %2095 = vmatpush1.xpose.msra.mxu0 0.0
    %2096 = vmatprep.subr.mxu0 0.0
    %2097 = vmatpush1.xpose.msra.mxu0 0.0
    %2098 = vmatprep.subr.mxu0 0.0
    %2099 = vmatpush1.xpose.msra.mxu0 0.0
    %2100 = vmatprep.subr.mxu0 0.0
    %2101 = vmatpush1.xpose.msra.mxu0 0.0
    %2102 = vmatprep.subr.mxu0 0.0
    %2103 = vmatpush1.xpose.msra.mxu0 0.0
    %2104 = vmatprep.subr.mxu0 0.0
    %2105 = vmatpush1.xpose.msra.mxu0 0.0
    %2106 = vmatprep.subr.mxu0 0.0
    %2107 = vmatpush1.xpose.msra.mxu0 0.0
    %2108 = vmatprep.subr.mxu0 0.0
    %2109 = vmatpush1.xpose.msra.mxu0 0.0
    %2110 = vmatprep.subr.mxu0 0.0
    %2111 = vmatpush1.xpose.msra.mxu0 0.0
    %2112 = vmatprep.subr.mxu0 0.0
    %2113 = vmatpush1.xpose.msra.mxu0 0.0
    %2114 = vmatprep.mubr.f32.mxu0 0.0
    %2115 = vmatmul.mubr.f32.gmra.mrb[0].mxu0 %v2046
    %v2116 = vpop.f32.mrb[0].mxu0
    %v2117 = vadd.f32 0.0, %v2116
    %v2118 = vpop.f32.mrb[0].mxu0
    %2119 = vdwg.mxu0
    %v2120 = vmul.f32 %v2117, 0.17677669
    %v2121 = vsel %vm162, %v2120, -inf
    %2122 = vmax.xlane.f32.xlu0 %v2121
    %v2123 = vpop.xlane.xlu0 %2122
    %v2124 = vsub.f32 %v2120, %v2123
    %v2125 = vmul.f32 %v2124, 1.442695
    %v2126 = vpow.pop %v2125
    %v2127 = vsel %vm162, %v2126, 0.0
    %2128 = vadd.xlane.f32.xlu0 %v2127
    %v2129 = vpop.xlane.xlu0 %2128
    %v2130 = vrcp.pop %v2129
    %v2131 = vmul.f32 %v2126, %v2130
    %2132 = vrot.lane.b32.xlu0 %v1324, 40
    %v2133 = vpop.permute.xlu0 %2132
    %v2136 = vsel %vm162, %v2131, 0
    %2138 = vmatprep.subr.mxu0 0.0
    %2139 = vmatpush1.msra.mxu0 %v2133
    %2140 = vmatprep.subr.mxu0 0.0
    %2141 = vmatpush1.msra.mxu0 0.0
    %2142 = vmatprep.subr.mxu0 0.0
    %2143 = vmatpush1.msra.mxu0 0.0
    %2144 = vmatprep.subr.mxu0 0.0
    %2145 = vmatpush1.msra.mxu0 0.0
    %2146 = vmatprep.subr.mxu0 0.0
    %2147 = vmatpush1.msra.mxu0 0.0
    %2148 = vmatprep.subr.mxu0 0.0
    %2149 = vmatpush1.msra.mxu0 0.0
    %2150 = vmatprep.subr.mxu0 0.0
    %2151 = vmatpush1.msra.mxu0 0.0
    %2152 = vmatprep.subr.mxu0 0.0
    %2153 = vmatpush1.msra.mxu0 0.0
    %2154 = vmatprep.subr.mxu0 0.0
    %2155 = vmatpush1.msra.mxu0 0.0
    %2156 = vmatprep.subr.mxu0 0.0
    %2157 = vmatpush1.msra.mxu0 0.0
    %2158 = vmatprep.subr.mxu0 0.0
    %2159 = vmatpush1.msra.mxu0 0.0
    %2160 = vmatprep.subr.mxu0 0.0
    %2161 = vmatpush1.msra.mxu0 0.0
    %2162 = vmatprep.subr.mxu0 0.0
    %2163 = vmatpush1.msra.mxu0 0.0
    %2164 = vmatprep.subr.mxu0 0.0
    %2165 = vmatpush1.msra.mxu0 0.0
    %2166 = vmatprep.subr.mxu0 0.0
    %2167 = vmatpush1.msra.mxu0 0.0
    %2168 = vmatprep.subr.mxu0 0.0
    %2169 = vmatpush1.msra.mxu0 0.0
    %2170 = vmatprep.subr.mxu0 0.0
    %2171 = vmatpush1.msra.mxu0 0.0
    %2172 = vmatprep.subr.mxu0 0.0
    %2173 = vmatpush1.msra.mxu0 0.0
    %2174 = vmatprep.subr.mxu0 0.0
    %2175 = vmatpush1.msra.mxu0 0.0
    %2176 = vmatprep.subr.mxu0 0.0
    %2177 = vmatpush1.msra.mxu0 0.0
    %2178 = vmatprep.subr.mxu0 0.0
    %2179 = vmatpush1.msra.mxu0 0.0
    %2180 = vmatprep.subr.mxu0 0.0
    %2181 = vmatpush1.msra.mxu0 0.0
    %2182 = vmatprep.subr.mxu0 0.0
    %2183 = vmatpush1.msra.mxu0 0.0
    %2184 = vmatprep.subr.mxu0 0.0
    %2185 = vmatpush1.msra.mxu0 0.0
    %2186 = vmatprep.subr.mxu0 0.0
    %2187 = vmatpush1.msra.mxu0 0.0
    %2188 = vmatprep.subr.mxu0 0.0
    %2189 = vmatpush1.msra.mxu0 0.0
    %2190 = vmatprep.subr.mxu0 0.0
    %2191 = vmatpush1.msra.mxu0 0.0
    %2192 = vmatprep.subr.mxu0 0.0
    %2193 = vmatpush1.msra.mxu0 0.0
    %2194 = vmatprep.subr.mxu0 0.0
    %2195 = vmatpush1.msra.mxu0 0.0
    %2196 = vmatprep.subr.mxu0 0.0
    %2197 = vmatpush1.msra.mxu0 0.0
    %2198 = vmatprep.subr.mxu0 0.0
    %2199 = vmatpush1.msra.mxu0 0.0
    %2200 = vmatprep.subr.mxu0 0.0
    %2201 = vmatpush1.msra.mxu0 0.0
    %2202 = vmatprep.mubr.f32.mxu0 0.0
    %2203 = vmatmul.mubr.f32.gmra.mrb[0].mxu0 %v2136
    %v2204 = vpop.f32.mrb[0].mxu0
    %v2205 = vadd.f32 0.0, %v2204
    %v2206 = vpop.f32.mrb[0].mxu0
    %2207 = vdwg.mxu0
    %v2209 = vsel %vm162, %v2205, 0
    %2211 = vmatprep.subr.mxu0 0.0
    %2212 = vmatpush1.msra.mxu0 %v151
    %2213 = vmatprep.subr.mxu0 0.0
    %2214 = vmatpush1.msra.mxu0 0.0
    %2215 = vmatprep.subr.mxu0 0.0
    %2216 = vmatpush1.msra.mxu0 0.0
    %2217 = vmatprep.subr.mxu0 0.0
    %2218 = vmatpush1.msra.mxu0 0.0
    %2219 = vmatprep.subr.mxu0 0.0
    %2220 = vmatpush1.msra.mxu0 0.0
    %2221 = vmatprep.subr.mxu0 0.0
    %2222 = vmatpush1.msra.mxu0 0.0
    %2223 = vmatprep.subr.mxu0 0.0
    %2224 = vmatpush1.msra.mxu0 0.0
    %2225 = vmatprep.subr.mxu0 0.0
    %2226 = vmatpush1.msra.mxu0 0.0
    %2227 = vmatprep.subr.mxu0 0.0
    %2228 = vmatpush1.msra.mxu0 0.0
    %2229 = vmatprep.subr.mxu0 0.0
    %2230 = vmatpush1.msra.mxu0 0.0
    %2231 = vmatprep.subr.mxu0 0.0
    %2232 = vmatpush1.msra.mxu0 0.0
    %2233 = vmatprep.subr.mxu0 0.0
    %2234 = vmatpush1.msra.mxu0 0.0
    %2235 = vmatprep.subr.mxu0 0.0
    %2236 = vmatpush1.msra.mxu0 0.0
    %2237 = vmatprep.subr.mxu0 0.0
    %2238 = vmatpush1.msra.mxu0 0.0
    %2239 = vmatprep.subr.mxu0 0.0
    %2240 = vmatpush1.msra.mxu0 0.0
    %2241 = vmatprep.subr.mxu0 0.0
    %2242 = vmatpush1.msra.mxu0 0.0
    %2243 = vmatprep.subr.mxu0 0.0
    %2244 = vmatpush1.msra.mxu0 0.0
    %2245 = vmatprep.subr.mxu0 0.0
    %2246 = vmatpush1.msra.mxu0 0.0
    %2247 = vmatprep.subr.mxu0 0.0
    %2248 = vmatpush1.msra.mxu0 0.0
    %2249 = vmatprep.subr.mxu0 0.0
    %2250 = vmatpush1.msra.mxu0 0.0
    %2251 = vmatprep.subr.mxu0 0.0
    %2252 = vmatpush1.msra.mxu0 0.0
    %2253 = vmatprep.subr.mxu0 0.0
    %2254 = vmatpush1.msra.mxu0 0.0
    %2255 = vmatprep.subr.mxu0 0.0
    %2256 = vmatpush1.msra.mxu0 0.0
    %2257 = vmatprep.subr.mxu0 0.0
    %2258 = vmatpush1.msra.mxu0 0.0
    %2259 = vmatprep.subr.mxu0 0.0
    %2260 = vmatpush1.msra.mxu0 0.0
    %2261 = vmatprep.subr.mxu0 0.0
    %2262 = vmatpush1.msra.mxu0 0.0
    %2263 = vmatprep.subr.mxu0 0.0
    %2264 = vmatpush1.msra.mxu0 0.0
    %2265 = vmatprep.subr.mxu0 0.0
    %2266 = vmatpush1.msra.mxu0 0.0
    %2267 = vmatprep.subr.mxu0 0.0
    %2268 = vmatpush1.msra.mxu0 0.0
    %2269 = vmatprep.subr.mxu0 0.0
    %2270 = vmatpush1.msra.mxu0 0.0
    %2271 = vmatprep.subr.mxu0 0.0
    %2272 = vmatpush1.msra.mxu0 0.0
    %2273 = vmatprep.subr.mxu0 0.0
    %2274 = vmatpush1.msra.mxu0 0.0
    %2275 = vmatprep.mubr.f32.mxu0 0.0
    %2276 = vmatmul.mubr.f32.gmra.mrb[0].mxu0 %v2209
    %v2277 = vpop.f32.mrb[0].mxu0
    %v2278 = vadd.f32 0.0, %v2277
    %v2279 = vpop.f32.mrb[0].mxu0
    %2280 = vdwg.mxu0
    %v2281 = vadd.f32 %v2041, %v2278
    %v2282 = vadd.f32 %v2281, %v1121
    %v2283 = vmax.f32 %v2282, 0.0
    %v2285 = vsel %vm65, %v2283, 0
    %2287 = vmatprep.subr.mxu0 0.0
    %2288 = vmatpush1.msra.mxu0 %v153
    %2289 = vmatprep.subr.mxu0 0.0
    %2290 = vmatpush1.msra.mxu0 %v154
    %2291 = vmatprep.subr.mxu0 0.0
    %2292 = vmatpush1.msra.mxu0 %v155
    %2293 = vmatprep.subr.mxu0 0.0
    %2294 = vmatpush1.msra.mxu0 %v156
    %2295 = vmatprep.subr.mxu0 0.0
    %2296 = vmatpush1.msra.mxu0 0.0
    %2297 = vmatprep.subr.mxu0 0.0
    %2298 = vmatpush1.msra.mxu0 0.0
    %2299 = vmatprep.subr.mxu0 0.0
    %2300 = vmatpush1.msra.mxu0 0.0
    %2301 = vmatprep.subr.mxu0 0.0
    %2302 = vmatpush1.msra.mxu0 0.0
    %2303 = vmatprep.subr.mxu0 0.0
    %2304 = vmatpush1.msra.mxu0 0.0
    %2305 = vmatprep.subr.mxu0 0.0
    %2306 = vmatpush1.msra.mxu0 0.0
    %2307 = vmatprep.subr.mxu0 0.0
    %2308 = vmatpush1.msra.mxu0 0.0
    %2309 = vmatprep.subr.mxu0 0.0
    %2310 = vmatpush1.msra.mxu0 0.0
    %2311 = vmatprep.subr.mxu0 0.0
    %2312 = vmatpush1.msra.mxu0 0.0
    %2313 = vmatprep.subr.mxu0 0.0
    %2314 = vmatpush1.msra.mxu0 0.0
    %2315 = vmatprep.subr.mxu0 0.0
    %2316 = vmatpush1.msra.mxu0 0.0
    %2317 = vmatprep.subr.mxu0 0.0
    %2318 = vmatpush1.msra.mxu0 0.0
    %2319 = vmatprep.subr.mxu0 0.0
    %2320 = vmatpush1.msra.mxu0 0.0
    %2321 = vmatprep.subr.mxu0 0.0
    %2322 = vmatpush1.msra.mxu0 0.0
    %2323 = vmatprep.subr.mxu0 0.0
    %2324 = vmatpush1.msra.mxu0 0.0
    %2325 = vmatprep.subr.mxu0 0.0
    %2326 = vmatpush1.msra.mxu0 0.0
    %2327 = vmatprep.subr.mxu0 0.0
    %2328 = vmatpush1.msra.mxu0 0.0
    %2329 = vmatprep.subr.mxu0 0.0
    %2330 = vmatpush1.msra.mxu0 0.0
    %2331 = vmatprep.subr.mxu0 0.0
    %2332 = vmatpush1.msra.mxu0 0.0
    %2333 = vmatprep.subr.mxu0 0.0
    %2334 = vmatpush1.msra.mxu0 0.0
    %2335 = vmatprep.subr.mxu0 0.0
    %2336 = vmatpush1.msra.mxu0 0.0
    %2337 = vmatprep.subr.mxu0 0.0
    %2338 = vmatpush1.msra.mxu0 0.0
    %2339 = vmatprep.subr.mxu0 0.0
    %2340 = vmatpush1.msra.mxu0 0.0
    %2341 = vmatprep.subr.mxu0 0.0
    %2342 = vmatpush1.msra.mxu0 0.0
    %2343 = vmatprep.subr.mxu0 0.0
    %2344 = vmatpush1.msra.mxu0 0.0
    %2345 = vmatprep.subr.mxu0 0.0
    %2346 = vmatpush1.msra.mxu0 0.0
    %2347 = vmatprep.subr.mxu0 0.0
    %2348 = vmatpush1.msra.mxu0 0.0
    %2349 = vmatprep.subr.mxu0 0.0
    %2350 = vmatpush1.msra.mxu0 0.0
    %2351 = vmatprep.mubr.f32.mxu0 0.0
    %2352 = vmatmul.mubr.f32.gmra.mrb[0].mxu0 %v2285
    %v2353 = vpop.f32.mrb[0].mxu0
    %v2354 = vadd.f32 %v1125, %v2353
    %v2355 = vpop.f32.mrb[0].mxu0
    %2356 = vdwg.mxu0
    %v2357 = vsel %vm1199, %v2354, -inf
    %v2358 = vrot.slane %v2357, 4
    %v2359 = vmax.f32 %v2357, %v2358
    %v2360 = vrot.slane %v2359, 2
    %v2361 = vmax.f32 %v2359, %v2360
    %v2362 = vrot.slane %v2361, 1
    %v2363 = vmax.f32 %v2361, %v2362
    %v2364 = vsub.f32 %v2354, %v2363
    %v2365 = vmul.f32 %v2364, 1.442695
    %v2366 = vpow.pop %v2365
    %v2367 = vsel %vm1199, %v2366, 0.0
    %v2368 = vrot.slane %v2367, 4
    %v2369 = vadd.f32 %v2367, %v2368
    %v2370 = vrot.slane %v2369, 2
    %v2371 = vadd.f32 %v2369, %v2370
    %v2372 = vrot.slane %v2371, 1
    %v2373 = vadd.f32 %v2371, %v2372
    %v2374 = vrcp.pop %v2373
    %v2375 = vmul.f32 %v2366, %v2374
    %2376 = vxpose.xlu0.b32.start [1/16] %v2375, 128
    %2377 = vxpose.xlu0.b32.cont [2/16] 0.0, 128
    %2378 = vxpose.xlu0.b32.cont [3/16] 0.0, 128
    %2379 = vxpose.xlu0.b32.cont [4/16] 0.0, 128
    %2380 = vxpose.xlu0.b32.cont [5/16] 0.0, 128
    %2381 = vxpose.xlu0.b32.cont [6/16] 0.0, 128
    %2382 = vxpose.xlu0.b32.cont [7/16] 0.0, 128
    %2383 = vxpose.xlu0.b32.cont [8/16] 0.0, 128
    %2384 = vxpose.xlu0.b32.cont [9/16] 0.0, 128
    %2385 = vxpose.xlu0.b32.cont [10/16] 0.0, 128
    %2386 = vxpose.xlu0.b32.cont [11/16] 0.0, 128
    %2387 = vxpose.xlu0.b32.cont [12/16] 0.0, 128
    %2388 = vxpose.xlu0.b32.cont [13/16] 0.0, 128
    %2389 = vxpose.xlu0.b32.cont [14/16] 0.0, 128
    %2390 = vxpose.xlu0.b32.cont [15/16] 0.0, 128
    %2391 = vxpose.xlu0.b32.end [16/16] 0.0, 128
    %v2392 = vpop.trf.xlu0
    %v2393 = vpop.trf.xlu0
    %v2394 = vpop.trf.xlu0
    %v2395 = vpop.trf.xlu0
    %v2396 = vpop.trf.xlu0
    %v2397 = vpop.trf.xlu0
    %v2398 = vpop.trf.xlu0
    %v2399 = vpop.trf.xlu0
    %v2400 = vpop.trf.xlu0
    %v2401 = vpop.trf.xlu0
    %v2402 = vpop.trf.xlu0
    %v2403 = vpop.trf.xlu0
    %v2404 = vpop.trf.xlu0
    %v2405 = vpop.trf.xlu0
    %v2406 = vpop.trf.xlu0
    %v2407 = vpop.trf.xlu0
    %v2409 = vsel %vm162, %v2392, 0
    %2411 = vmatprep.subr.mxu0 0.0
    %2412 = vmatpush1.msra.mxu0 %v2283
    %2413 = vmatprep.subr.mxu0 0.0
    %2414 = vmatpush1.msra.mxu0 0.0
    %2415 = vmatprep.subr.mxu0 0.0
    %2416 = vmatpush1.msra.mxu0 0.0
    %2417 = vmatprep.subr.mxu0 0.0
    %2418 = vmatpush1.msra.mxu0 0.0
    %2419 = vmatprep.subr.mxu0 0.0
    %2420 = vmatpush1.msra.mxu0 0.0
    %2421 = vmatprep.subr.mxu0 0.0
    %2422 = vmatpush1.msra.mxu0 0.0
    %2423 = vmatprep.subr.mxu0 0.0
    %2424 = vmatpush1.msra.mxu0 0.0
    %2425 = vmatprep.subr.mxu0 0.0
    %2426 = vmatpush1.msra.mxu0 0.0
    %2427 = vmatprep.subr.mxu0 0.0
    %2428 = vmatpush1.msra.mxu0 0.0
    %2429 = vmatprep.subr.mxu0 0.0
    %2430 = vmatpush1.msra.mxu0 0.0
    %2431 = vmatprep.subr.mxu0 0.0
    %2432 = vmatpush1.msra.mxu0 0.0
    %2433 = vmatprep.subr.mxu0 0.0
    %2434 = vmatpush1.msra.mxu0 0.0
    %2435 = vmatprep.subr.mxu0 0.0
    %2436 = vmatpush1.msra.mxu0 0.0
    %2437 = vmatprep.subr.mxu0 0.0
    %2438 = vmatpush1.msra.mxu0 0.0
    %2439 = vmatprep.subr.mxu0 0.0
    %2440 = vmatpush1.msra.mxu0 0.0
    %2441 = vmatprep.subr.mxu0 0.0
    %2442 = vmatpush1.msra.mxu0 0.0
    %2443 = vmatprep.subr.mxu0 0.0
    %2444 = vmatpush1.msra.mxu0 0.0
    %2445 = vmatprep.subr.mxu0 0.0
    %2446 = vmatpush1.msra.mxu0 0.0
    %2447 = vmatprep.subr.mxu0 0.0
    %2448 = vmatpush1.msra.mxu0 0.0
    %2449 = vmatprep.subr.mxu0 0.0
    %2450 = vmatpush1.msra.mxu0 0.0
    %2451 = vmatprep.subr.mxu0 0.0
    %2452 = vmatpush1.msra.mxu0 0.0
    %2453 = vmatprep.subr.mxu0 0.0
    %2454 = vmatpush1.msra.mxu0 0.0
    %2455 = vmatprep.subr.mxu0 0.0
    %2456 = vmatpush1.msra.mxu0 0.0
    %2457 = vmatprep.subr.mxu0 0.0
    %2458 = vmatpush1.msra.mxu0 0.0
    %2459 = vmatprep.subr.mxu0 0.0
    %2460 = vmatpush1.msra.mxu0 0.0
    %2461 = vmatprep.subr.mxu0 0.0
    %2462 = vmatpush1.msra.mxu0 0.0
    %2463 = vmatprep.subr.mxu0 0.0
    %2464 = vmatpush1.msra.mxu0 0.0
    %2465 = vmatprep.subr.mxu0 0.0
    %2466 = vmatpush1.msra.mxu0 0.0
    %2467 = vmatprep.subr.mxu0 0.0
    %2468 = vmatpush1.msra.mxu0 0.0
    %2469 = vmatprep.subr.mxu0 0.0
    %2470 = vmatpush1.msra.mxu0 0.0
    %2471 = vmatprep.subr.mxu0 0.0
    %2472 = vmatpush1.msra.mxu0 0.0
    %2473 = vmatprep.subr.mxu0 0.0
    %2474 = vmatpush1.msra.mxu0 0.0
    %2475 = vmatprep.mubr.f32.mxu0 0.0
    %2476 = vmatmul.mubr.f32.gmra.mrb[0].mxu0 %v2409
    %v2477 = vpop.f32.mrb[0].mxu0
    %v2478 = vadd.f32 0.0, %v2477
    %v2479 = vpop.f32.mrb[0].mxu0
    %2480 = vdwg.mxu0
    %2481 = vst.msk [vmem:[#allocation8] sm:$0xff] %vm65, %v1124
    %2482 = vst.msk [vmem:[#allocation8 + $0x8] sm:$0xff] %vm65, %v2283
    %vm2483 = vcmask 253952
    %2484 = vst.msk [vmem:[#allocation9] sm:$0x1] %vm2483, %v1321
    %2485 = vst.msk [vmem:[#allocation9 + $0x1] sm:$0x1] %vm2483, %v2478
    // Predicated region
    $region38: #{tpu_custom_call.1} parent=1 // pred_check
      _
    $region39: #{tpu_custom_call.1} parent=1 // pred_check_branch
      %2487 = sbr.rel (0) target = $region41
    $region40: #{tpu_custom_call.1} parent=1 // pred_region
      %s2489 = ssub.s32 256, 256
      %2490 = vsyncadd [#allocation5], %s2489
      %s2491 = sshll.u32 [#allocation8], 4
      %s2492 = int_to_ptr.vmem [resolvable:$true] %s2491
      %2497 = dma.vmem_to_hbm [thread:$0]  %s2492, 256, %s7, [#allocation5], 128, 128, 8
    $region41: #{tpu_custom_call.1} parent=1 // pred_fallthru
      _
    // Predicated region
    $region42: #{tpu_custom_call.1} parent=1 // pred_check
      _
    $region43: #{tpu_custom_call.1} parent=1 // pred_check_branch
      %2499 = sbr.rel (0) target = $region45
    $region44: #{tpu_custom_call.1} parent=1 // pred_region
      %s2501 = ssub.s32 32, 32
      %2502 = vsyncadd [#allocation10], %s2501
      %s2503 = sshll.u32 [#allocation9], 4
      %s2504 = int_to_ptr.vmem [resolvable:$true] %s2503
      %2509 = dma.vmem_to_hbm [thread:$0]  %s2504, 32, %s8, [#allocation10], 16, 16, 1
    $region45: #{tpu_custom_call.1} parent=1 // pred_fallthru
      _
    // Predicated region
    $region46: #{tpu_custom_call.1} parent=1 // pred_check
      _
    $region47: #{tpu_custom_call.1} parent=1 // pred_check_branch
      %2511 = sbr.rel (0) target = $region49
    $region48: #{tpu_custom_call.1} parent=1 // pred_region
      %2512 = dma.done [#allocation5], 256
    $region49: #{tpu_custom_call.1} parent=1 // pred_fallthru
      _
    // Predicated region
    $region50: #{tpu_custom_call.1} parent=1 // pred_check
      _
    $region51: #{tpu_custom_call.1} parent=1 // pred_check_branch
      %2514 = sbr.rel (0) target = $region53
    $region52: #{tpu_custom_call.1} parent=1 // pred_region
      %2515 = dma.done [#allocation10], 32
    $region53: #{tpu_custom_call.1} parent=1 // pred_fallthru
      _
    %2516 = vsyncpa [#allocation4], 1
    %2517 = vsyncpa [#allocation7], 1
    %2518 = vsyncpa [#allocation5], 1
    %2519 = vsyncpa [#allocation10], 1

</llo_original>
